<compile_context>
chip_gen: v7x
topology: tpu7x:2x2x1
jax: 0.10.0
libtpu: 0.0.40
codegen_flags: <defaults>
</compile_context>

<pallas_src>
import functools
from typing import Any, NamedTuple, Tuple

import jax
import jax.numpy as jnp
from jax.experimental import pallas as pl
from jax.experimental.pallas import tpu as pltpu


_LANE = 128        # lane width; every feature dim is zero-padded up to this
_SUBLANE = 8
_TILE_B_CAP = 1024  # largest batch tile handed to a single grid step


def _round_up(n, m):
    return ((n + m - 1) // m) * m


def _cdiv(a, b):
    return -(-a // b)


# ---------------------------------------------------------------------------
# Kernel
# ---------------------------------------------------------------------------
def _mlp_kernel(n_layers, out_dim, out_padded, *refs):
    """refs layout: x_ref, w0, b0, w1, b1, ..., w_{L-1}, b_{L-1}, out_ref."""
    x_ref = refs[0]
    out_ref = refs[-1]
    param_refs = refs[1:-1]

    h = x_ref[...]                              # (TILE_B, in_pad) compute dtype (bf16)
    z = None
    for i in range(n_layers):
        w = param_refs[2 * i][...]              # (in_pad, out_pad) compute dtype
        b = param_refs[2 * i + 1][...]          # (1, out_pad) f32
        z = jnp.dot(h, w, preferred_element_type=jnp.float32) + b
        if i < n_layers - 1:
            # ReLU commutes with the bf16 downcast: run max(.,0) on packed
            # bf16 vregs (half the VALU work on v6e/v7x; neutral on v5e).
            h = jnp.maximum(z.astype(w.dtype), 0)
        else:
            z = jnp.maximum(z, 0.0)             # final ReLU in f32, feeds softmax

    # Softmax over dim=1 (f32).  Padded lanes (>= out_dim) are masked to -inf
    # so exp() gives exactly 0 there; skip the mask when the real output width
    # is already lane-aligned (static Python branch).
    if out_dim < out_padded:
        col = jax.lax.broadcasted_iota(jnp.int32, z.shape, 1)
        z = jnp.where(col < out_dim, z, -jnp.inf)
    m = jnp.max(z, axis=1, keepdims=True)
    e = jnp.exp(z - m)                          # exp(-inf) == 0 on padded lanes
    denom = jnp.sum(e, axis=1, keepdims=True)
    # Exact divide (NOT pl.reciprocal(approx=True)): rows must sum to 1.
    out_ref[...] = (e / denom).astype(out_ref.dtype)


# ---------------------------------------------------------------------------
# Parameter preparation (hoisted out of the per-call hot path)
# ---------------------------------------------------------------------------
class PreparedMLP(NamedTuple):
    params: Tuple[jax.Array, ...]   # interleaved (w0_p, b0_p, w1_p, b1_p, ...)
    dims: Tuple[int, ...]           # original feature sizes (in, h1, ..., out)
    pdims: Tuple[int, ...]          # lane-padded feature sizes
    compute_dtype: Any


def prepare_mlp_params(weights, biases, *, compute_dtype=jnp.bfloat16, lane=_LANE):
    """Pad + cast parameters ONCE; reuse the result across forward calls."""
    # TODO(synk): make `lane` generation-dependent (256 on v6e/v7x for layers
    # >= 256 wide to fill the 2x256x256 MXU); 128 is optimal for this toy net
    # and for v5e's 128x128 MXUs.
    dims = tuple([weights[0].shape[0]] + [w.shape[1] for w in weights])
    pdims = tuple(_round_up(d, lane) for d in dims)
    params = []
    for i, (w, b) in enumerate(zip(weights, biases)):
        w_p = jnp.pad(w.astype(compute_dtype),
                      ((0, pdims[i] - w.shape[0]),
                       (0, pdims[i + 1] - w.shape[1])))
        b2 = jnp.reshape(b, (1, -1)).astype(jnp.float32)
        b_p = jnp.pad(b2, ((0, 0), (0, pdims[i + 1] - b2.shape[1])))
        params.extend([w_p, b_p])
    return PreparedMLP(tuple(params), dims, pdims, compute_dtype)


def _vmem_limit_bytes(tile_b, pdims, params, compute_dtype, out_dtype):
    """Scoped-VMEM limit from actual buffer sizes, with generation-aware cap."""
    c_item = jnp.dtype(compute_dtype).itemsize
    o_item = jnp.dtype(out_dtype).itemsize
    # Double-buffered activation/output tiles; count params as double-buffered
    # too so the limit also covers the (rare) fallback to default buffering.
    needed = (2 * tile_b * pdims[0] * c_item
              + 2 * tile_b * pdims[-1] * o_item
              + 2 * sum(int(p.size) * jnp.dtype(p.dtype).itemsize for p in params))
    try:
        phys = int(pltpu.get_tpu_info().vmem_capacity_bytes)  # 128 MiB v5e/v6e, 64 MiB v7x
    except Exception:
        phys = 64 << 20                                        # assume smallest (v7x)
    cap = (phys * 3) // 4                                      # headroom for compiler scratch
    return int(min(max(2 * needed + (8 << 20), 32 << 20), cap))


# ---------------------------------------------------------------------------
# Forward pass
# ---------------------------------------------------------------------------
def mlp_forward_prepared(x, prepared: PreparedMLP, *, tile_b=None,
                         out_dtype=jnp.float32, single_buffer_params=True):
    """x: (B, sizes[0]) f32  ->  (B, sizes[-1]) softmax probabilities."""
    n_layers = len(prepared.params) // 2
    dims, pdims = prepared.dims, prepared.pdims
    compute_dtype = prepared.compute_dtype
    batch, in_dim = x.shape
    assert in_dim == dims[0]
    out_dim = dims[-1]

    # ---- batch tiling ------------------------------------------------------
    # This net is per-grid-step / per-DMA-overhead bound, so prefer few fat
    # tiles; but always emit >= 2 balanced grid steps (when the batch allows)
    # so v7x's two TensorCores both get work under ("parallel",) semantics.
    if tile_b is None:
        b8 = _round_up(batch, _SUBLANE)
        if b8 <= 2 * _SUBLANE:
            tile_b = b8
        elif b8 <= 2 * _TILE_B_CAP:
            tile_b = _round_up(_cdiv(b8, 2), _SUBLANE)
        else:
            tile_b = _TILE_B_CAP
    tile_b = _round_up(tile_b, _SUBLANE)
    b_pad = _round_up(batch, tile_b)
    grid = (b_pad // tile_b,)

    # Lane-dense zero padding of the input (zero rows/lanes keep the math exact).
    x_p = jnp.pad(x.astype(compute_dtype),
                  ((0, b_pad - batch), (0, pdims[0] - in_dim)))

    out_spec = pl.BlockSpec((tile_b, pdims[-1]), lambda i: (i, 0))

    def make_in_specs(single_buffer):
        specs = [pl.BlockSpec((tile_b, pdims[0]), lambda i: (i, 0))]
        for p in prepared.params:
            if single_buffer:
                # Constant block index -> nothing to prefetch; single-buffer to
                # halve the resident-parameter VMEM footprint (matters on v7x).
                specs.append(pl.BlockSpec(p.shape, lambda i: (0, 0),
                                          pipeline_mode=pl.Buffered(1)))
            else:
                specs.append(pl.BlockSpec(p.shape, lambda i: (0, 0)))
        return specs

    # Scheduler hint for XLA when this call is embedded in a larger graph.
    c_item = jnp.dtype(compute_dtype).itemsize
    flops = 2 * b_pad * sum(pdims[i] * pdims[i + 1] for i in range(n_layers))
    bytes_accessed = (
        b_pad * pdims[0] * c_item
        + sum(int(p.size) * jnp.dtype(p.dtype).itemsize for p in prepared.params)
        + b_pad * pdims[-1] * jnp.dtype(out_dtype).itemsize)
    cost = pl.CostEstimate(flops=flops, transcendentals=b_pad * pdims[-1],
                           bytes_accessed=bytes_accessed)

    compiler_params = pltpu.CompilerParams(
        dimension_semantics=("parallel",),
        vmem_limit_bytes=_vmem_limit_bytes(tile_b, pdims, prepared.params,
                                           compute_dtype, out_dtype))

    kernel = functools.partial(_mlp_kernel, n_layers, out_dim, pdims[-1])

    def call(single_buffer):
        return pl.pallas_call(
            kernel,
            out_shape=jax.ShapeDtypeStruct((b_pad, pdims[-1]), out_dtype),
            grid=grid,
            in_specs=make_in_specs(single_buffer),
            out_specs=out_spec,
            compiler_params=compiler_params,
            cost_estimate=cost,
        )(x_p, *prepared.params)

    if single_buffer_params:
        try:
            out_p = call(True)
        except Exception:
            # pl.Buffered(1) unsupported by this jax/Mosaic build; fall back to
            # default double-buffering (identical results, a bit more VMEM).
            out_p = call(False)
    else:
        out_p = call(False)

    # Strip batch padding and lane padding.
    return out_p[:batch, :out_dim]


def mlp_forward(x, weights, biases, **kwargs):
    """Convenience wrapper; hot paths should call prepare_mlp_params once."""
    return mlp_forward_prepared(x, prepare_mlp_params(weights, biases), **kwargs)


# ---------------------------------------------------------------------------
# Init + references
# ---------------------------------------------------------------------------
def init_params(sizes, key):
    """Deterministic init mimicking torch.nn.Linear's U(-1/sqrt(in), 1/sqrt(in))."""
    weights, biases = [], []
    for i in range(len(sizes) - 1):
        fan_in, fan_out = sizes[i], sizes[i + 1]
        key, kw, kb = jax.random.split(key, 3)
        bound = 1.0 / jnp.sqrt(jnp.float32(fan_in))
        w = jax.random.uniform(kw, (fan_in, fan_out), jnp.float32, -bound, bound)
        b = jax.random.uniform(kb, (1, fan_out), jnp.float32, -bound, bound)
        weights.append(w)
        biases.append(b)
    return weights, biases


def reference_forward_f32(x, weights, biases):
    """Pure-f32 reference matching the PyTorch module semantics."""
    h = x
    for w, b in zip(weights, biases):
        h = jnp.maximum(h @ w + b, 0.0)
    return jax.nn.softmax(h, axis=1)


def reference_forward_matched(x, weights, biases, compute_dtype=jnp.bfloat16):
    """Reference with the same bf16-in / f32-accumulate numerics as the kernel."""
    h = x.astype(compute_dtype)
    z = None
    for w, b in zip(weights, biases):
        z = jnp.dot(h, w.astype(compute_dtype),
                    preferred_element_type=jnp.float32) + b.astype(jnp.float32)
        z = jnp.maximum(z, 0.0)
        h = z.astype(compute_dtype)
    return jax.nn.softmax(z, axis=1)


if __name__ == "__main__":
    key = jax.random.PRNGKey(0)
    sizes = [16, 32, 32, 8]   # MLP(sizes): 3 Linear layers
    batch = 40                # small, but exercises multi-step grid + padding

    key, kx = jax.random.split(key)
    x = jax.random.normal(kx, (batch, sizes[0]), jnp.float32)
    weights, biases = init_params(sizes, key)

    # Pad/cast params once (hoisted out of the hot path), then run the kernel.
    prepared = prepare_mlp_params(weights, biases)
    out = jax.block_until_ready(mlp_forward_prepared(x, prepared))

    assert out.shape == (batch, sizes[-1])

    # Tight check against a reference with matching bf16-MXU / f32-accum numerics.
    ref_match = reference_forward_matched(x, weights, biases)
    assert jnp.allclose(out, ref_match, atol=2e-3, rtol=2e-3), (
        float(jnp.max(jnp.abs(out - ref_match))))

    # Loose sanity check against the pure-f32 module semantics.
    ref_f32 = reference_forward_f32(x, weights, biases)
    assert jnp.allclose(out, ref_f32, atol=5e-2), (
        float(jnp.max(jnp.abs(out - ref_f32))))

    # Rows are proper probability distributions (exact divide in the kernel).
    assert jnp.allclose(jnp.sum(out, axis=1), 1.0, atol=1e-4)

    print("KERNEL_OK")
</pallas_src>

<mosaic_0001>
module attributes {stable_mosaic.version = 11 : i64} {
  func.func @_mlp_kernel(%arg0: i32, %arg1: memref<24x128xbf16, #tpu.memory_space<vmem>>, %arg2: memref<128x128xbf16, #tpu.memory_space<vmem>>, %arg3: memref<1x128xf32, #tpu.memory_space<vmem>>, %arg4: memref<128x128xbf16, #tpu.memory_space<vmem>>, %arg5: memref<1x128xf32, #tpu.memory_space<vmem>>, %arg6: memref<128x128xbf16, #tpu.memory_space<vmem>>, %arg7: memref<1x128xf32, #tpu.memory_space<vmem>>, %arg8: memref<24x128xf32, #tpu.memory_space<vmem>>) attributes {dimension_semantics = [#tpu.dimension_semantics<parallel>], iteration_bounds = array<i64: 2>, scalar_prefetch = 0 : i64, scratch_operands = 0 : i64, tpu.core_type = #tpu.core_type<tc>, window_params = [{transform_indices = @transform_0, window_bounds = array<i64: 24, 128>}, {pipeline_mode = #tpu.pipeline_mode<synchronous>, transform_indices = @transform_1, window_bounds = array<i64: 128, 128>}, {pipeline_mode = #tpu.pipeline_mode<synchronous>, transform_indices = @transform_2, window_bounds = array<i64: 1, 128>}, {pipeline_mode = #tpu.pipeline_mode<synchronous>, transform_indices = @transform_3, window_bounds = array<i64: 128, 128>}, {pipeline_mode = #tpu.pipeline_mode<synchronous>, transform_indices = @transform_4, window_bounds = array<i64: 1, 128>}, {pipeline_mode = #tpu.pipeline_mode<synchronous>, transform_indices = @transform_5, window_bounds = array<i64: 128, 128>}, {pipeline_mode = #tpu.pipeline_mode<synchronous>, transform_indices = @transform_6, window_bounds = array<i64: 1, 128>}, {transform_indices = @transform_7, window_bounds = array<i64: 24, 128>}]} {
    %c0 = arith.constant 0 : index
    %c0_0 = arith.constant 0 : index
    %0 = vector.load %arg1[%c0, %c0_0] : memref<24x128xbf16, #tpu.memory_space<vmem>>, vector<24x128xbf16>
    %c0_1 = arith.constant 0 : index
    %c0_2 = arith.constant 0 : index
    %1 = vector.load %arg2[%c0_1, %c0_2] : memref<128x128xbf16, #tpu.memory_space<vmem>>, vector<128x128xbf16>
    %c0_3 = arith.constant 0 : index
    %c0_4 = arith.constant 0 : index
    %2 = vector.load %arg3[%c0_3, %c0_4] : memref<1x128xf32, #tpu.memory_space<vmem>>, vector<1x128xf32>
    %cst = arith.constant dense<0.000000e+00> : vector<24x128xf32>
    %3 = tpu.matmul %0, %1, %cst {dimension_numbers = #tpu.dot_dimension_numbers<[1], [0], [0], [1], [0, 0, 1, 1], [], []>} : vector<24x128xbf16>, vector<128x128xbf16>, vector<24x128xf32> -> vector<24x128xf32>
    %4 = vector.broadcast %2 : vector<1x128xf32> to vector<24x128xf32>
    %5 = arith.addf %3, %4 : vector<24x128xf32>
    %6 = arith.truncf %5 : vector<24x128xf32> to vector<24x128xbf16>
    %cst_5 = arith.constant 0.000000e+00 : bf16
    %7 = vector.broadcast %cst_5 : bf16 to vector<24x128xbf16>
    %8 = arith.maximumf %6, %7 : vector<24x128xbf16>
    %c0_6 = arith.constant 0 : index
    %c0_7 = arith.constant 0 : index
    %9 = vector.load %arg4[%c0_6, %c0_7] : memref<128x128xbf16, #tpu.memory_space<vmem>>, vector<128x128xbf16>
    %c0_8 = arith.constant 0 : index
    %c0_9 = arith.constant 0 : index
    %10 = vector.load %arg5[%c0_8, %c0_9] : memref<1x128xf32, #tpu.memory_space<vmem>>, vector<1x128xf32>
    %cst_10 = arith.constant dense<0.000000e+00> : vector<24x128xf32>
    %11 = tpu.matmul %8, %9, %cst_10 {dimension_numbers = #tpu.dot_dimension_numbers<[1], [0], [0], [1], [0, 0, 1, 1], [], []>} : vector<24x128xbf16>, vector<128x128xbf16>, vector<24x128xf32> -> vector<24x128xf32>
    %12 = vector.broadcast %10 : vector<1x128xf32> to vector<24x128xf32>
    %13 = arith.addf %11, %12 : vector<24x128xf32>
    %14 = arith.truncf %13 : vector<24x128xf32> to vector<24x128xbf16>
    %cst_11 = arith.constant 0.000000e+00 : bf16
    %15 = vector.broadcast %cst_11 : bf16 to vector<24x128xbf16>
    %16 = arith.maximumf %14, %15 : vector<24x128xbf16>
    %c0_12 = arith.constant 0 : index
    %c0_13 = arith.constant 0 : index
    %17 = vector.load %arg6[%c0_12, %c0_13] : memref<128x128xbf16, #tpu.memory_space<vmem>>, vector<128x128xbf16>
    %c0_14 = arith.constant 0 : index
    %c0_15 = arith.constant 0 : index
    %18 = vector.load %arg7[%c0_14, %c0_15] : memref<1x128xf32, #tpu.memory_space<vmem>>, vector<1x128xf32>
    %cst_16 = arith.constant dense<0.000000e+00> : vector<24x128xf32>
    %19 = tpu.matmul %16, %17, %cst_16 {dimension_numbers = #tpu.dot_dimension_numbers<[1], [0], [0], [1], [0, 0, 1, 1], [], []>} : vector<24x128xbf16>, vector<128x128xbf16>, vector<24x128xf32> -> vector<24x128xf32>
    %20 = vector.broadcast %18 : vector<1x128xf32> to vector<24x128xf32>
    %21 = arith.addf %19, %20 : vector<24x128xf32>
    %cst_17 = arith.constant 0.000000e+00 : f32
    %22 = vector.broadcast %cst_17 : f32 to vector<24x128xf32>
    %23 = arith.maximumf %21, %22 : vector<24x128xf32>
    %24 = tpu.iota {dimensions = array<i32: 1>} : vector<24x128xi32>
    %c8_i32 = arith.constant 8 : i32
    %25 = vector.broadcast %c8_i32 : i32 to vector<24x128xi32>
    %26 = arith.cmpi slt, %24, %25 : vector<24x128xi32>
    %cst_18 = arith.constant 0xFF800000 : f32
    %27 = vector.broadcast %cst_18 : f32 to vector<24x128xf32>
    %28 = arith.select %26, %23, %27 : vector<24x128xi1>, vector<24x128xf32>
    %cst_19 = arith.constant dense<0xFF800000> : vector<24xf32>
    %29 = vector.multi_reduction <maximumf>, %28, %cst_19 [1] : vector<24x128xf32> to vector<24xf32>
    %30 = vector.shape_cast %29 : vector<24xf32> to vector<24x1xf32>
    %31 = vector.broadcast %30 : vector<24x1xf32> to vector<24x128xf32>
    %32 = arith.subf %28, %31 : vector<24x128xf32>
    %33 = math.exp %32 : vector<24x128xf32>
    %cst_20 = arith.constant dense<0.000000e+00> : vector<24xf32>
    %34 = vector.multi_reduction <add>, %33, %cst_20 [1] : vector<24x128xf32> to vector<24xf32>
    %35 = vector.shape_cast %34 : vector<24xf32> to vector<24x1xf32>
    %36 = vector.broadcast %35 : vector<24x1xf32> to vector<24x128xf32>
    %37 = arith.divf %33, %36 : vector<24x128xf32>
    %c0_21 = arith.constant 0 : index
    %c0_22 = arith.constant 0 : index
    %38 = vector.load %arg8[%c0_21, %c0_22] : memref<24x128xf32, #tpu.memory_space<vmem>>, vector<24x128xf32>
    tpu.vector_store %arg8[%c0_21, %c0_22], %37 {strides = array<i32>} : memref<24x128xf32, #tpu.memory_space<vmem>>, vector<24x128xf32>,
    return
  }
  func.func @transform_0(%arg0: i32) -> (i32, i32) {
    %c0_i32 = arith.constant 0 : i32
    %c0_i32_0 = arith.constant 0 : i32
    return %arg0, %c0_i32 : i32, i32
  }
  func.func @transform_1(%arg0: i32) -> (i32, i32) {
    %c0_i32 = arith.constant 0 : i32
    %c0_i32_0 = arith.constant 0 : i32
    %c0_i32_1 = arith.constant 0 : i32
    return %c0_i32, %c0_i32_0 : i32, i32
  }
  func.func @transform_2(%arg0: i32) -> (i32, i32) {
    %c0_i32 = arith.constant 0 : i32
    %c0_i32_0 = arith.constant 0 : i32
    %c0_i32_1 = arith.constant 0 : i32
    return %c0_i32, %c0_i32_0 : i32, i32
  }
  func.func @transform_3(%arg0: i32) -> (i32, i32) {
    %c0_i32 = arith.constant 0 : i32
    %c0_i32_0 = arith.constant 0 : i32
    %c0_i32_1 = arith.constant 0 : i32
    return %c0_i32, %c0_i32_0 : i32, i32
  }
  func.func @transform_4(%arg0: i32) -> (i32, i32) {
    %c0_i32 = arith.constant 0 : i32
    %c0_i32_0 = arith.constant 0 : i32
    %c0_i32_1 = arith.constant 0 : i32
    return %c0_i32, %c0_i32_0 : i32, i32
  }
  func.func @transform_5(%arg0: i32) -> (i32, i32) {
    %c0_i32 = arith.constant 0 : i32
    %c0_i32_0 = arith.constant 0 : i32
    %c0_i32_1 = arith.constant 0 : i32
    return %c0_i32, %c0_i32_0 : i32, i32
  }
  func.func @transform_6(%arg0: i32) -> (i32, i32) {
    %c0_i32 = arith.constant 0 : i32
    %c0_i32_0 = arith.constant 0 : i32
    %c0_i32_1 = arith.constant 0 : i32
    return %c0_i32, %c0_i32_0 : i32, i32
  }
  func.func @transform_7(%arg0: i32) -> (i32, i32) {
    %c0_i32 = arith.constant 0 : i32
    %c0_i32_0 = arith.constant 0 : i32
    return %arg0, %c0_i32 : i32, i32
  }
}

module attributes {stable_mosaic.version = 11 : i64} {
  func.func @_mlp_kernel(%arg0: i32, %arg1: memref<24x128xbf16, #tpu.memory_space<vmem>>, %arg2: memref<128x128xbf16, #tpu.memory_space<vmem>>, %arg3: memref<1x128xf32, #tpu.memory_space<vmem>>, %arg4: memref<128x128xbf16, #tpu.memory_space<vmem>>, %arg5: memref<1x128xf32, #tpu.memory_space<vmem>>, %arg6: memref<128x128xbf16, #tpu.memory_space<vmem>>, %arg7: memref<1x128xf32, #tpu.memory_space<vmem>>, %arg8: memref<24x128xf32, #tpu.memory_space<vmem>>) attributes {dimension_semantics = [#tpu.dimension_semantics<parallel>], iteration_bounds = array<i64: 2>, scalar_prefetch = 0 : i64, scratch_operands = 0 : i64, tpu.core_type = #tpu.core_type<tc>, window_params = [{transform_indices = @transform_0, window_bounds = array<i64: 24, 128>}, {pipeline_mode = #tpu.pipeline_mode<synchronous>, transform_indices = @transform_1, window_bounds = array<i64: 128, 128>}, {pipeline_mode = #tpu.pipeline_mode<synchronous>, transform_indices = @transform_2, window_bounds = array<i64: 1, 128>}, {pipeline_mode = #tpu.pipeline_mode<synchronous>, transform_indices = @transform_3, window_bounds = array<i64: 128, 128>}, {pipeline_mode = #tpu.pipeline_mode<synchronous>, transform_indices = @transform_4, window_bounds = array<i64: 1, 128>}, {pipeline_mode = #tpu.pipeline_mode<synchronous>, transform_indices = @transform_5, window_bounds = array<i64: 128, 128>}, {pipeline_mode = #tpu.pipeline_mode<synchronous>, transform_indices = @transform_6, window_bounds = array<i64: 1, 128>}, {transform_indices = @transform_7, window_bounds = array<i64: 24, 128>}]} {
    %c0 = arith.constant 0 : index
    %c0_0 = arith.constant 0 : index
    %0 = vector.load %arg1[%c0, %c0_0] : memref<24x128xbf16, #tpu.memory_space<vmem>>, vector<24x128xbf16>
    %c0_1 = arith.constant 0 : index
    %c0_2 = arith.constant 0 : index
    %1 = vector.load %arg2[%c0_1, %c0_2] : memref<128x128xbf16, #tpu.memory_space<vmem>>, vector<128x128xbf16>
    %c0_3 = arith.constant 0 : index
    %c0_4 = arith.constant 0 : index
    %2 = vector.load %arg3[%c0_3, %c0_4] : memref<1x128xf32, #tpu.memory_space<vmem>>, vector<1x128xf32>
    %cst = arith.constant dense<0.000000e+00> : vector<24x128xf32>
    %3 = tpu.matmul %0, %1, %cst {dimension_numbers = #tpu.dot_dimension_numbers<[1], [0], [0], [1], [0, 0, 1, 1], [], []>} : vector<24x128xbf16>, vector<128x128xbf16>, vector<24x128xf32> -> vector<24x128xf32>
    %4 = vector.broadcast %2 : vector<1x128xf32> to vector<24x128xf32>
    %5 = arith.addf %3, %4 : vector<24x128xf32>
    %6 = arith.truncf %5 : vector<24x128xf32> to vector<24x128xbf16>
    %cst_5 = arith.constant 0.000000e+00 : bf16
    %7 = vector.broadcast %cst_5 : bf16 to vector<24x128xbf16>
    %8 = arith.maximumf %6, %7 : vector<24x128xbf16>
    %c0_6 = arith.constant 0 : index
    %c0_7 = arith.constant 0 : index
    %9 = vector.load %arg4[%c0_6, %c0_7] : memref<128x128xbf16, #tpu.memory_space<vmem>>, vector<128x128xbf16>
    %c0_8 = arith.constant 0 : index
    %c0_9 = arith.constant 0 : index
    %10 = vector.load %arg5[%c0_8, %c0_9] : memref<1x128xf32, #tpu.memory_space<vmem>>, vector<1x128xf32>
    %cst_10 = arith.constant dense<0.000000e+00> : vector<24x128xf32>
    %11 = tpu.matmul %8, %9, %cst_10 {dimension_numbers = #tpu.dot_dimension_numbers<[1], [0], [0], [1], [0, 0, 1, 1], [], []>} : vector<24x128xbf16>, vector<128x128xbf16>, vector<24x128xf32> -> vector<24x128xf32>
    %12 = vector.broadcast %10 : vector<1x128xf32> to vector<24x128xf32>
    %13 = arith.addf %11, %12 : vector<24x128xf32>
    %14 = arith.truncf %13 : vector<24x128xf32> to vector<24x128xbf16>
    %cst_11 = arith.constant 0.000000e+00 : bf16
    %15 = vector.broadcast %cst_11 : bf16 to vector<24x128xbf16>
    %16 = arith.maximumf %14, %15 : vector<24x128xbf16>
    %c0_12 = arith.constant 0 : index
    %c0_13 = arith.constant 0 : index
    %17 = vector.load %arg6[%c0_12, %c0_13] : memref<128x128xbf16, #tpu.memory_space<vmem>>, vector<128x128xbf16>
    %c0_14 = arith.constant 0 : index
    %c0_15 = arith.constant 0 : index
    %18 = vector.load %arg7[%c0_14, %c0_15] : memref<1x128xf32, #tpu.memory_space<vmem>>, vector<1x128xf32>
    %cst_16 = arith.constant dense<0.000000e+00> : vector<24x128xf32>
    %19 = tpu.matmul %16, %17, %cst_16 {dimension_numbers = #tpu.dot_dimension_numbers<[1], [0], [0], [1], [0, 0, 1, 1], [], []>} : vector<24x128xbf16>, vector<128x128xbf16>, vector<24x128xf32> -> vector<24x128xf32>
    %20 = vector.broadcast %18 : vector<1x128xf32> to vector<24x128xf32>
    %21 = arith.addf %19, %20 : vector<24x128xf32>
    %cst_17 = arith.constant 0.000000e+00 : f32
    %22 = vector.broadcast %cst_17 : f32 to vector<24x128xf32>
    %23 = arith.maximumf %21, %22 : vector<24x128xf32>
    %24 = tpu.iota {dimensions = array<i32: 1>} : vector<24x128xi32>
    %c8_i32 = arith.constant 8 : i32
    %25 = vector.broadcast %c8_i32 : i32 to vector<24x128xi32>
    %26 = arith.cmpi slt, %24, %25 : vector<24x128xi32>
    %cst_18 = arith.constant 0xFF800000 : f32
    %27 = vector.broadcast %cst_18 : f32 to vector<24x128xf32>
    %28 = arith.select %26, %23, %27 : vector<24x128xi1>, vector<24x128xf32>
    %cst_19 = arith.constant dense<0xFF800000> : vector<24xf32>
    %29 = vector.multi_reduction <maximumf>, %28, %cst_19 [1] : vector<24x128xf32> to vector<24xf32>
    %30 = vector.shape_cast %29 : vector<24xf32> to vector<24x1xf32>
    %31 = vector.broadcast %30 : vector<24x1xf32> to vector<24x128xf32>
    %32 = arith.subf %28, %31 : vector<24x128xf32>
    %33 = math.exp %32 : vector<24x128xf32>
    %cst_20 = arith.constant dense<0.000000e+00> : vector<24xf32>
    %34 = vector.multi_reduction <add>, %33, %cst_20 [1] : vector<24x128xf32> to vector<24xf32>
    %35 = vector.shape_cast %34 : vector<24xf32> to vector<24x1xf32>
    %36 = vector.broadcast %35 : vector<24x1xf32> to vector<24x128xf32>
    %37 = arith.divf %33, %36 : vector<24x128xf32>
    %c0_21 = arith.constant 0 : index
    %c0_22 = arith.constant 0 : index
    %38 = vector.load %arg8[%c0_21, %c0_22] : memref<24x128xf32, #tpu.memory_space<vmem>>, vector<24x128xf32>
    tpu.vector_store %arg8[%c0_21, %c0_22], %37 {strides = array<i32>} : memref<24x128xf32, #tpu.memory_space<vmem>>, vector<24x128xf32>,
    return
  }
  func.func @transform_0(%arg0: i32) -> (i32, i32) {
    %c0_i32 = arith.constant 0 : i32
    %c0_i32_0 = arith.constant 0 : i32
    return %arg0, %c0_i32 : i32, i32
  }
  func.func @transform_1(%arg0: i32) -> (i32, i32) {
    %c0_i32 = arith.constant 0 : i32
    %c0_i32_0 = arith.constant 0 : i32
    %c0_i32_1 = arith.constant 0 : i32
    return %c0_i32, %c0_i32_0 : i32, i32
  }
  func.func @transform_2(%arg0: i32) -> (i32, i32) {
    %c0_i32 = arith.constant 0 : i32
    %c0_i32_0 = arith.constant 0 : i32
    %c0_i32_1 = arith.constant 0 : i32
    return %c0_i32, %c0_i32_0 : i32, i32
  }
  func.func @transform_3(%arg0: i32) -> (i32, i32) {
    %c0_i32 = arith.constant 0 : i32
    %c0_i32_0 = arith.constant 0 : i32
    %c0_i32_1 = arith.constant 0 : i32
    return %c0_i32, %c0_i32_0 : i32, i32
  }
  func.func @transform_4(%arg0: i32) -> (i32, i32) {
    %c0_i32 = arith.constant 0 : i32
    %c0_i32_0 = arith.constant 0 : i32
    %c0_i32_1 = arith.constant 0 : i32
    return %c0_i32, %c0_i32_0 : i32, i32
  }
  func.func @transform_5(%arg0: i32) -> (i32, i32) {
    %c0_i32 = arith.constant 0 : i32
    %c0_i32_0 = arith.constant 0 : i32
    %c0_i32_1 = arith.constant 0 : i32
    return %c0_i32, %c0_i32_0 : i32, i32
  }
  func.func @transform_6(%arg0: i32) -> (i32, i32) {
    %c0_i32 = arith.constant 0 : i32
    %c0_i32_0 = arith.constant 0 : i32
    %c0_i32_1 = arith.constant 0 : i32
    return %c0_i32, %c0_i32_0 : i32, i32
  }
  func.func @transform_7(%arg0: i32) -> (i32, i32) {
    %c0_i32 = arith.constant 0 : i32
    %c0_i32_0 = arith.constant 0 : i32
    return %arg0, %c0_i32 : i32, i32
  }
}

</mosaic_0001>

<llo_original>
// kernel: tpu_custom_call.1
$region0: #{tpu_custom_call.1}
  #allocation0 [shape = 'u32[]', space=smem, size = 0x4, offset = 0x4, fixed_abs, tag = 'smem constant byte address 0x4 - core index']
  #allocation1 [shape = 'u32[144,128]{1,0:T(1,128)}', space=vmem, size = 0x12000, scoped, tag = 'internal scratch']
  %s0 = inlined_call_operand.hbm [shape: bf16[48,128], index: 0, kind: input, shape index: {}]
  %s1 = inlined_call_operand.hbm [shape: bf16[128,128], index: 1, kind: input, shape index: {}]
  %s2 = inlined_call_operand.vmem [shape: f32[1,128], index: 2, kind: input, shape index: {}]
  %s3 = inlined_call_operand.hbm [shape: bf16[128,128], index: 3, kind: input, shape index: {}]
  %s4 = inlined_call_operand.vmem [shape: f32[1,128], index: 4, kind: input, shape index: {}]
  %s5 = inlined_call_operand.hbm [shape: bf16[128,128], index: 5, kind: input, shape index: {}]
  %s6 = inlined_call_operand.vmem [shape: f32[1,128], index: 6, kind: input, shape index: {}]
  %s7 = inlined_call_operand.hbm [shape: f32[48,128], index: 7, kind: output, shape index: {}]
  %s8 = sld [smem:[#allocation0]]
  $region77: #{tpu_custom_call.1} parent=0
    _
  %s10 = ssub.s32 1, %s8
  %s11 = scalar_select 0, %s10, %s8
  $region1: #{tpu_custom_call.1} parent=0
    #allocation2 [shape = 'u8[12288]{0}', space=vmem, size = 0x3000, scoped, tag = 'input window, operand 0']
    #allocation3 [shape = 's32[2]{0}', space=sflag, size = 0x8, scoped, tag = 'scoped memory for tpu_custom_call.1']
    #allocation4 [shape = 's32[2]{0}', space=sflag, size = 0x8, scoped, tag = 'scoped memory for tpu_custom_call.1']
    #allocation5 [shape = 'u8[32768]{0}', space=vmem, size = 0x8000, scoped, tag = 'input window, operand 1, single buffered']
    #allocation6 [shape = 's32[1]{0}', space=sflag, size = 0x4, scoped, tag = 'scoped memory for tpu_custom_call.1']
    #allocation7 [shape = 'u8[32768]{0}', space=vmem, size = 0x8000, scoped, tag = 'input window, operand 3, single buffered']
    #allocation8 [shape = 'u8[32768]{0}', space=vmem, size = 0x8000, scoped, tag = 'input window, operand 5, single buffered']
    #allocation9 [shape = 's32[1]{0}', space=sflag, size = 0x4, scoped, tag = 'scoped memory for tpu_custom_call.1']
    #allocation10 [shape = 'u8[24576]{0}', space=vmem, size = 0x6000, scoped, tag = 'output window, operand 0']
    %12 = vsyncpa [#allocation3], 0
    %s13 = scalar_lea.sflag [#allocation3], 1
    %14 = vsyncpa %s13, 0
    %15 = vsyncpa [#allocation6], 0
    %16 = vsyncpa [#allocation9], 0
    %17 = vsyncpa [#allocation4], 0
    %s18 = scalar_lea.sflag [#allocation4], 1
    %19 = vsyncpa %s18, 0
    loop: start=0, step=1, limit=4
    $region2: #{tpu_custom_call.1} parent=1 // loop_pre_header
      _
    $region3: #{tpu_custom_call.1} parent=1 // loop_header
      %s21 = sphi 0, %s25
      %p22 = scmp.ge.s32.totalorder %s21, 4
      %s31 = sphi 0, %s33
      %s34 = sphi 0, %s31
      %s35 = sphi 0, %s34
      %s51 = sphi 0, %s35
      %s55 = sphi 0, %s55
      %s57 = sphi 0, %s55
      %s58 = sphi 0, %s57
      %s72 = sphi 0, %s58
      %s76 = sphi 0, %s76
      %s78 = sphi 0, %s76
      %s79 = sphi 0, %s78
      %s93 = sphi 0, %s79
      %s97 = sphi 0, %s97
      %s99 = sphi 0, %s97
      %s100 = sphi 0, %s99
      %s114 = sphi 0, %s100
      %s118 = sphi 0, %s118
      %s120 = sphi 0, %s118
      %s121 = sphi 0, %s120
      %s135 = sphi 0, %s121
      %s139 = sphi 0, %s139
      %s141 = sphi 0, %s139
      %s142 = sphi 0, %s141
      %s156 = sphi 0, %s142
      %s160 = sphi 0, %s160
      %s162 = sphi 0, %s160
      %s163 = sphi 0, %s162
      %s177 = sphi 0, %s163
      %s183 = sphi 0, %s185
      %s186 = sphi 0, %s183
      %s187 = sphi 0, %s186
      %s203 = sphi 0, %s187
    $region4: #{tpu_custom_call.1} parent=1 // loop_header_branch
      %24 = sbr.rel (%p22) target = $region8
    $region5: #{tpu_custom_call.1} parent=1 // loop_body
      %s26 = ssub.s32 %s21, 1
      %s27 = ssub.s32 %s21, 2
      %s28 = sadd.s32 %s21, 1
      %s29 = ssub.s32 %s21, %s28
      %p30 = scmp.eq.s32.totalorder %s29, 0
      %s32 = sadd.s32 %s31, 1
      %s33 = scalar_select %p30, %s31, %s32
      %p36 = pneg %p30
      %p37 = scmp.eq.s32.totalorder %s21, 1
      %p38 = por %p36, %p37
      %p39 = scmp.ne.s32.totalorder %s31, %s34
      %p40 = scmp.eq.s32.totalorder %s21, 0
      %p41 = por %p39, %p40
      %p42 = scmp.ne.s32.totalorder %s31, %s34
      %p43 = scmp.eq.s32.totalorder %s26, 1
      %p44 = por %p42, %p43
      %p45 = scmp.ne.s32.totalorder %s34, %s35
      %p46 = scmp.eq.s32.totalorder %s26, 0
      %p47 = por %p45, %p46
      %p48 = scmp.ne.s32.totalorder %s34, %s35
      %p49 = scmp.eq.s32.totalorder %s27, 1
      %p50 = por %p48, %p49
      %p52 = scmp.ne.s32.totalorder %s35, %s51
      %p53 = scmp.eq.s32.totalorder %s27, 0
      %p54 = por %p52, %p53
      %s56 = sadd.s32 %s55, 1
      %p59 = scmp.eq.s32.totalorder %s21, 1
      %p60 = scmp.ne.s32.totalorder %s55, %s57
      %p61 = scmp.eq.s32.totalorder %s21, 0
      %p62 = por %p60, %p61
      %p63 = scmp.ne.s32.totalorder %s55, %s57
      %p64 = scmp.eq.s32.totalorder %s26, 1
      %p65 = por %p63, %p64
      %p66 = scmp.ne.s32.totalorder %s57, %s58
      %p67 = scmp.eq.s32.totalorder %s26, 0
      %p68 = por %p66, %p67
      %p69 = scmp.ne.s32.totalorder %s57, %s58
      %p70 = scmp.eq.s32.totalorder %s27, 1
      %p71 = por %p69, %p70
      %p73 = scmp.ne.s32.totalorder %s58, %s72
      %p74 = scmp.eq.s32.totalorder %s27, 0
      %p75 = por %p73, %p74
      %s77 = sadd.s32 %s76, 1
      %p80 = scmp.eq.s32.totalorder %s21, 1
      %p81 = scmp.ne.s32.totalorder %s76, %s78
      %p82 = scmp.eq.s32.totalorder %s21, 0
      %p83 = por %p81, %p82
      %p84 = scmp.ne.s32.totalorder %s76, %s78
      %p85 = scmp.eq.s32.totalorder %s26, 1
      %p86 = por %p84, %p85
      %p87 = scmp.ne.s32.totalorder %s78, %s79
      %p88 = scmp.eq.s32.totalorder %s26, 0
      %p89 = por %p87, %p88
      %p90 = scmp.ne.s32.totalorder %s78, %s79
      %p91 = scmp.eq.s32.totalorder %s27, 1
      %p92 = por %p90, %p91
      %p94 = scmp.ne.s32.totalorder %s79, %s93
      %p95 = scmp.eq.s32.totalorder %s27, 0
      %p96 = por %p94, %p95
      %s98 = sadd.s32 %s97, 1
      %p101 = scmp.eq.s32.totalorder %s21, 1
      %p102 = scmp.ne.s32.totalorder %s97, %s99
      %p103 = scmp.eq.s32.totalorder %s21, 0
      %p104 = por %p102, %p103
      %p105 = scmp.ne.s32.totalorder %s97, %s99
      %p106 = scmp.eq.s32.totalorder %s26, 1
      %p107 = por %p105, %p106
      %p108 = scmp.ne.s32.totalorder %s99, %s100
      %p109 = scmp.eq.s32.totalorder %s26, 0
      %p110 = por %p108, %p109
      %p111 = scmp.ne.s32.totalorder %s99, %s100
      %p112 = scmp.eq.s32.totalorder %s27, 1
      %p113 = por %p111, %p112
      %p115 = scmp.ne.s32.totalorder %s100, %s114
      %p116 = scmp.eq.s32.totalorder %s27, 0
      %p117 = por %p115, %p116
      %s119 = sadd.s32 %s118, 1
      %p122 = scmp.eq.s32.totalorder %s21, 1
      %p123 = scmp.ne.s32.totalorder %s118, %s120
      %p124 = scmp.eq.s32.totalorder %s21, 0
      %p125 = por %p123, %p124
      %p126 = scmp.ne.s32.totalorder %s118, %s120
      %p127 = scmp.eq.s32.totalorder %s26, 1
      %p128 = por %p126, %p127
      %p129 = scmp.ne.s32.totalorder %s120, %s121
      %p130 = scmp.eq.s32.totalorder %s26, 0
      %p131 = por %p129, %p130
      %p132 = scmp.ne.s32.totalorder %s120, %s121
      %p133 = scmp.eq.s32.totalorder %s27, 1
      %p134 = por %p132, %p133
      %p136 = scmp.ne.s32.totalorder %s121, %s135
      %p137 = scmp.eq.s32.totalorder %s27, 0
      %p138 = por %p136, %p137
      %s140 = sadd.s32 %s139, 1
      %p143 = scmp.eq.s32.totalorder %s21, 1
      %p144 = scmp.ne.s32.totalorder %s139, %s141
      %p145 = scmp.eq.s32.totalorder %s21, 0
      %p146 = por %p144, %p145
      %p147 = scmp.ne.s32.totalorder %s139, %s141
      %p148 = scmp.eq.s32.totalorder %s26, 1
      %p149 = por %p147, %p148
      %p150 = scmp.ne.s32.totalorder %s141, %s142
      %p151 = scmp.eq.s32.totalorder %s26, 0
      %p152 = por %p150, %p151
      %p153 = scmp.ne.s32.totalorder %s141, %s142
      %p154 = scmp.eq.s32.totalorder %s27, 1
      %p155 = por %p153, %p154
      %p157 = scmp.ne.s32.totalorder %s142, %s156
      %p158 = scmp.eq.s32.totalorder %s27, 0
      %p159 = por %p157, %p158
      %s161 = sadd.s32 %s160, 1
      %p164 = scmp.eq.s32.totalorder %s21, 1
      %p165 = scmp.ne.s32.totalorder %s160, %s162
      %p166 = scmp.eq.s32.totalorder %s21, 0
      %p167 = por %p165, %p166
      %p168 = scmp.ne.s32.totalorder %s160, %s162
      %p169 = scmp.eq.s32.totalorder %s26, 1
      %p170 = por %p168, %p169
      %p171 = scmp.ne.s32.totalorder %s162, %s163
      %p172 = scmp.eq.s32.totalorder %s26, 0
      %p173 = por %p171, %p172
      %p174 = scmp.ne.s32.totalorder %s162, %s163
      %p175 = scmp.eq.s32.totalorder %s27, 1
      %p176 = por %p174, %p175
      %p178 = scmp.ne.s32.totalorder %s163, %s177
      %p179 = scmp.eq.s32.totalorder %s27, 0
      %p180 = por %p178, %p179
      %s181 = ssub.s32 %s21, %s28
      %p182 = scmp.eq.s32.totalorder %s181, 0
      %s184 = sadd.s32 %s183, 1
      %s185 = scalar_select %p182, %s183, %s184
      %p188 = pneg %p182
      %p189 = scmp.eq.s32.totalorder %s21, 1
      %p190 = por %p188, %p189
      %p191 = scmp.ne.s32.totalorder %s183, %s186
      %p192 = scmp.eq.s32.totalorder %s21, 0
      %p193 = por %p191, %p192
      %p194 = scmp.ne.s32.totalorder %s183, %s186
      %p195 = scmp.eq.s32.totalorder %s26, 1
      %p196 = por %p194, %p195
      %p197 = scmp.ne.s32.totalorder %s186, %s187
      %p198 = scmp.eq.s32.totalorder %s26, 0
      %p199 = por %p197, %p198
      %p200 = scmp.ne.s32.totalorder %s186, %s187
      %p201 = scmp.eq.s32.totalorder %s27, 1
      %p202 = por %p200, %p201
      %p204 = scmp.ne.s32.totalorder %s187, %s203
      %p205 = scmp.eq.s32.totalorder %s27, 0
      %p206 = por %p204, %p205
      %p207 = scmp.le.s32.totalorder 1, %s21
      %p208 = scmp.lt.s32.totalorder %s21, 3
      %p209 = pnand %p207, %p208
      %p210 = pneg %p209
      // Predicated region
      $region9: #{tpu_custom_call.1} parent=5 // pred_check
        _
      $region10: #{tpu_custom_call.1} parent=5 // pred_check_branch
        %212 = sbr.rel (%p209) target = $region12
      $region11: #{tpu_custom_call.1} parent=5 // pred_region
        %s213 = ssub.s32 %s21, 1
        // Predicated region
        $region13: #{tpu_custom_call.1} parent=11 // pred_check
          %p214 = pneg %p68
        $region14: #{tpu_custom_call.1} parent=11 // pred_check_branch
          %216 = sbr.rel (%p214) target = $region16
        $region15: #{tpu_custom_call.1} parent=11 // pred_region
          %s218 = ssub.s32 1024, 1024
          %219 = vsyncadd [#allocation6], %s218
          %s220 = sshll.u32 [#allocation5], 4
          %s221 = int_to_ptr.vmem [resolvable:$true] %s220
          %226 = dma.hbm_to_vmem [thread:$0]  %s1, 1024, %s221, [#allocation6], 64, 64, 4
        $region16: #{tpu_custom_call.1} parent=11 // pred_fallthru
          _
        // Predicated region
        $region17: #{tpu_custom_call.1} parent=11 // pred_check
          %p227 = pneg %p89
        $region18: #{tpu_custom_call.1} parent=11 // pred_check_branch
          %229 = sbr.rel (%p227) target = $region20
        $region19: #{tpu_custom_call.1} parent=11 // pred_region
          _
        $region20: #{tpu_custom_call.1} parent=11 // pred_fallthru
          _
        // Predicated region
        $region21: #{tpu_custom_call.1} parent=11 // pred_check
          %p230 = pneg %p110
        $region22: #{tpu_custom_call.1} parent=11 // pred_check_branch
          %232 = sbr.rel (%p230) target = $region24
        $region23: #{tpu_custom_call.1} parent=11 // pred_region
          %s234 = ssub.s32 1024, 1024
          %235 = vsyncadd [#allocation6], %s234
          %s236 = sshll.u32 [#allocation7], 4
          %s237 = int_to_ptr.vmem [resolvable:$true] %s236
          %242 = dma.hbm_to_vmem [thread:$0]  %s3, 1024, %s237, [#allocation6], 64, 64, 4
        $region24: #{tpu_custom_call.1} parent=11 // pred_fallthru
          _
        // Predicated region
        $region25: #{tpu_custom_call.1} parent=11 // pred_check
          %p243 = pneg %p131
        $region26: #{tpu_custom_call.1} parent=11 // pred_check_branch
          %245 = sbr.rel (%p243) target = $region28
        $region27: #{tpu_custom_call.1} parent=11 // pred_region
          _
        $region28: #{tpu_custom_call.1} parent=11 // pred_fallthru
          _
        // Predicated region
        $region29: #{tpu_custom_call.1} parent=11 // pred_check
          %p246 = pneg %p152
        $region30: #{tpu_custom_call.1} parent=11 // pred_check_branch
          %248 = sbr.rel (%p246) target = $region32
        $region31: #{tpu_custom_call.1} parent=11 // pred_region
          %s250 = ssub.s32 1024, 1024
          %251 = vsyncadd [#allocation9], %s250
          %s252 = sshll.u32 [#allocation8], 4
          %s253 = int_to_ptr.vmem [resolvable:$true] %s252
          %258 = dma.hbm_to_vmem [thread:$0]  %s5, 1024, %s253, [#allocation9], 64, 64, 4
        $region32: #{tpu_custom_call.1} parent=11 // pred_fallthru
          _
        // Predicated region
        $region33: #{tpu_custom_call.1} parent=11 // pred_check
          %p259 = pneg %p173
        $region34: #{tpu_custom_call.1} parent=11 // pred_check_branch
          %261 = sbr.rel (%p259) target = $region36
        $region35: #{tpu_custom_call.1} parent=11 // pred_region
          _
        $region36: #{tpu_custom_call.1} parent=11 // pred_fallthru
          _
      $region12: #{tpu_custom_call.1} parent=5 // pred_fallthru
        _
      %p262 = scmp.lt.s32.totalorder %s21, 2
      // Predicated region
      $region37: #{tpu_custom_call.1} parent=5 // pred_check
        %p263 = pneg %p262
      $region38: #{tpu_custom_call.1} parent=5 // pred_check_branch
        %265 = sbr.rel (%p263) target = $region40
      $region39: #{tpu_custom_call.1} parent=5 // pred_region
        // Predicated region
        $region41: #{tpu_custom_call.1} parent=39 // pred_check
          %p266 = pneg %p41
        $region42: #{tpu_custom_call.1} parent=39 // pred_check_branch
          %268 = sbr.rel (%p266) target = $region44
        $region43: #{tpu_custom_call.1} parent=39 // pred_region
          %s269 = sand.u32 %s31, 1
          %s270 = scalar_lea.sflag [#allocation3], %s269
          %s271 = sand.u32 %s31, 1
          %s272 = smul.addr %s271, 12
          %s273 = scalar_lea.vmem [#allocation2], %s272
          %s274 = smul.u32 3, %s21
          %s276 = ssub.s32 192, 192
          %277 = vsyncadd %s270, %s276
          %s278 = smul.addr %s274, 64
          %s279 = scalar_lea.hbm %s0, %s278
          %s280 = sshll.u32 %s273, 4
          %s281 = int_to_ptr.vmem [resolvable:$true] %s280
          %286 = dma.hbm_to_vmem [thread:$0]  %s279, 192, %s281, %s270, 64, 64, 4
        $region44: #{tpu_custom_call.1} parent=39 // pred_fallthru
          _
      $region40: #{tpu_custom_call.1} parent=5 // pred_fallthru
        _
      %p287 = scmp.le.s32.totalorder 1, %s21
      %p288 = scmp.lt.s32.totalorder %s21, 3
      %p289 = pnand %p287, %p288
      %p290 = pneg %p289
      // Predicated region
      $region45: #{tpu_custom_call.1} parent=5 // pred_check
        _
      $region46: #{tpu_custom_call.1} parent=5 // pred_check_branch
        %292 = sbr.rel (%p289) target = $region48
      $region47: #{tpu_custom_call.1} parent=5 // pred_region
        %s293 = ssub.s32 %s21, 1
        %s294 = sand.u32 %s34, 1
        %s295 = scalar_lea.sflag [#allocation3], %s294
        %s296 = sand.u32 %s34, 1
        %s297 = smul.addr %s296, 12
        %s298 = scalar_lea.vmem [#allocation2], %s297
        // Predicated region
        $region49: #{tpu_custom_call.1} parent=47 // pred_check
          %p299 = pneg %p47
        $region50: #{tpu_custom_call.1} parent=47 // pred_check_branch
          %301 = sbr.rel (%p299) target = $region52
        $region51: #{tpu_custom_call.1} parent=47 // pred_region
          %302 = dma.done %s295, 192
        $region52: #{tpu_custom_call.1} parent=47 // pred_fallthru
          _
        // Predicated region
        $region53: #{tpu_custom_call.1} parent=47 // pred_check
          %p303 = pneg %p68
        $region54: #{tpu_custom_call.1} parent=47 // pred_check_branch
          %305 = sbr.rel (%p303) target = $region56
        $region55: #{tpu_custom_call.1} parent=47 // pred_region
          %306 = dma.done [#allocation6], 1024
        $region56: #{tpu_custom_call.1} parent=47 // pred_fallthru
          _
        // Predicated region
        $region57: #{tpu_custom_call.1} parent=47 // pred_check
          %p307 = pneg %p110
        $region58: #{tpu_custom_call.1} parent=47 // pred_check_branch
          %309 = sbr.rel (%p307) target = $region60
        $region59: #{tpu_custom_call.1} parent=47 // pred_region
          %310 = dma.done [#allocation6], 1024
        $region60: #{tpu_custom_call.1} parent=47 // pred_fallthru
          _
        // Predicated region
        $region61: #{tpu_custom_call.1} parent=47 // pred_check
          %p311 = pneg %p152
        $region62: #{tpu_custom_call.1} parent=47 // pred_check_branch
          %313 = sbr.rel (%p311) target = $region64
        $region63: #{tpu_custom_call.1} parent=47 // pred_region
          %314 = dma.done [#allocation9], 1024
        $region64: #{tpu_custom_call.1} parent=47 // pred_fallthru
          _
        %s315 = sand.u32 %s34, 1
        %s316 = scalar_lea.sflag [#allocation3], %s315
        %s317 = sand.u32 %s34, 1
        %s318 = smul.addr %s317, 12
        %s319 = scalar_lea.vmem [#allocation2], %s318
        %p320 = pneg %p47
        %p321 = pneg %p44
        %p322 = pneg %p68
        %p323 = pneg %p65
        %p324 = pneg %p89
        %p325 = pneg %p86
        %p326 = pneg %p110
        %p327 = pneg %p107
        %p328 = pneg %p131
        %p329 = pneg %p128
        %p330 = pneg %p152
        %p331 = pneg %p149
        %p332 = pneg %p173
        %p333 = pneg %p170
        %p334 = pneg %p199
        %p335 = pneg %p196
        %s336 = sand.u32 %s186, 1
        %s337 = scalar_lea.sflag [#allocation4], %s336
        %s338 = sand.u32 %s186, 1
        %s339 = smul.addr %s338, 24
        %s340 = scalar_lea.vmem [#allocation10], %s339
        %s341 = smul.u32 3, %s26
        %s342 = smul.u32 3, %s26
        %v344 = vld [vmem:[%s298] sm:$0xf]
        %v345 = vld [vmem:[%s298 + $0x4] sm:$0xf]
        %v346 = vld [vmem:[%s298 + $0x8] sm:$0xf]
        %v347 = vld [vmem:[#allocation5] sm:$0xf]
        %v348 = vld [vmem:[#allocation5 + $0x4] sm:$0xf]
        %v349 = vld [vmem:[#allocation5 + $0x8] sm:$0xf]
        %v350 = vld [vmem:[#allocation5 + $0xc] sm:$0xf]
        %v351 = vld [vmem:[#allocation5 + $0x10] sm:$0xf]
        %v352 = vld [vmem:[#allocation5 + $0x14] sm:$0xf]
        %v353 = vld [vmem:[#allocation5 + $0x18] sm:$0xf]
        %v354 = vld [vmem:[#allocation5 + $0x1c] sm:$0xf]
        %v355 = vld [vmem:[#allocation5 + $0x20] sm:$0xf]
        %v356 = vld [vmem:[#allocation5 + $0x24] sm:$0xf]
        %v357 = vld [vmem:[#allocation5 + $0x28] sm:$0xf]
        %v358 = vld [vmem:[#allocation5 + $0x2c] sm:$0xf]
        %v359 = vld [vmem:[#allocation5 + $0x30] sm:$0xf]
        %v360 = vld [vmem:[#allocation5 + $0x34] sm:$0xf]
        %v361 = vld [vmem:[#allocation5 + $0x38] sm:$0xf]
        %v362 = vld [vmem:[#allocation5 + $0x3c] sm:$0xf]
        %v363 = vld [vmem:[%s2] sm:$0x1]
        %v365 = vlaneseq
        %v366 = vshrl.u32 %v365, 7
        %v367 = vsub.s32 0, %v366
        %v368 = vrot.slane %v363, %v367
        %v373 = vunpack.c.l.b16 %v344
        %v374 = vunpack.c.l.b16 %v345
        %v375 = vunpack.c.l.b16 %v346
        %v376 = vpack.c.b16 %v374, %v373
        %v377 = vpack.c.b16 %v375, %v375
        %v396 = vunpack.c.l.b16 %v347
        %v397 = vunpack.c.l.b16 %v348
        %v398 = vunpack.c.l.b16 %v349
        %v399 = vunpack.c.l.b16 %v350
        %v400 = vunpack.c.l.b16 %v351
        %v401 = vunpack.c.l.b16 %v352
        %v402 = vunpack.c.l.b16 %v353
        %v403 = vunpack.c.l.b16 %v354
        %v404 = vunpack.c.l.b16 %v355
        %v405 = vunpack.c.l.b16 %v356
        %v406 = vunpack.c.l.b16 %v357
        %v407 = vunpack.c.l.b16 %v358
        %v408 = vunpack.c.l.b16 %v359
        %v409 = vunpack.c.l.b16 %v360
        %v410 = vunpack.c.l.b16 %v361
        %v411 = vunpack.c.l.b16 %v362
        %v412 = vpack.c.b16 %v397, %v396
        %v413 = vpack.c.b16 %v399, %v398
        %v414 = vpack.c.b16 %v401, %v400
        %v415 = vpack.c.b16 %v403, %v402
        %v416 = vpack.c.b16 %v405, %v404
        %v417 = vpack.c.b16 %v407, %v406
        %v418 = vpack.c.b16 %v409, %v408
        %v419 = vpack.c.b16 %v411, %v410
        %428 = vmatprep.subr.bf16.mxu0 0
        %429 = vmatpush1.bf16.msra.mxu0 %v412
        %430 = vmatprep.subr.bf16.mxu0 0
        %431 = vmatpush1.bf16.msra.mxu0 %v413
        %432 = vmatprep.subr.bf16.mxu0 0
        %433 = vmatpush1.bf16.msra.mxu0 %v414
        %434 = vmatprep.subr.bf16.mxu0 0
        %435 = vmatpush1.bf16.msra.mxu0 %v415
        %436 = vmatprep.subr.bf16.mxu0 0
        %437 = vmatpush1.bf16.msra.mxu0 %v416
        %438 = vmatprep.subr.bf16.mxu0 0
        %439 = vmatpush1.bf16.msra.mxu0 %v417
        %440 = vmatprep.subr.bf16.mxu0 0
        %441 = vmatpush1.bf16.msra.mxu0 %v418
        %442 = vmatprep.subr.bf16.mxu0 0
        %443 = vmatpush1.bf16.msra.mxu0 %v419
        %444 = vmatprep.subr.bf16.mxu0 0
        %445 = vmatpush1.bf16.msra.mxu0 0
        %446 = vmatprep.subr.bf16.mxu0 0
        %447 = vmatpush1.bf16.msra.mxu0 0
        %448 = vmatprep.subr.bf16.mxu0 0
        %449 = vmatpush1.bf16.msra.mxu0 0
        %450 = vmatprep.subr.bf16.mxu0 0
        %451 = vmatpush1.bf16.msra.mxu0 0
        %452 = vmatprep.subr.bf16.mxu0 0
        %453 = vmatpush1.bf16.msra.mxu0 0
        %454 = vmatprep.subr.bf16.mxu0 0
        %455 = vmatpush1.bf16.msra.mxu0 0
        %456 = vmatprep.subr.bf16.mxu0 0
        %457 = vmatpush1.bf16.msra.mxu0 0
        %458 = vmatprep.subr.bf16.mxu0 0
        %459 = vmatpush1.bf16.msra.mxu0 0
        %460 = vmatprep.mubr.bf16.mxu0 0
        %461 = vmatmul.mubr.bf16.gmra.mrb[0].mxu0 %v376
        %v462 = vpop.f32.mrb[0].mxu0
        %v463 = vadd.f32 %v368, %v462
        %v464 = vpop.f32.mrb[0].mxu0
        %v465 = vpop.f32.mrb[0].mxu0
        %v466 = vadd.f32 %v368, %v465
        %v467 = vpop.f32.mrb[0].mxu0
        %468 = vmatprep.mubr.bf16.mxu0 0
        %469 = vmatmul.mubr.bf16.gmra.mrb[0].mxu0 %v377
        %v470 = vpop.f32.mrb[0].mxu0
        %v471 = vadd.f32 %v368, %v470
        %v472 = vpop.f32.mrb[0].mxu0
        %v473 = vpop.f32.mrb[0].mxu0
        %v474 = vpop.f32.mrb[0].mxu0
        %475 = vdwg.mxu0
        %v476 = vpack.c.bf16 %v466, %v463
        %v477 = vpack.c.bf16 %v471, %v471
        %v478 = vmax.bf16 %v476, 0
        %v479 = vmax.bf16 %v477, 0
        %v480 = vld [vmem:[#allocation7] sm:$0xf]
        %v481 = vld [vmem:[#allocation7 + $0x4] sm:$0xf]
        %v482 = vld [vmem:[#allocation7 + $0x8] sm:$0xf]
        %v483 = vld [vmem:[#allocation7 + $0xc] sm:$0xf]
        %v484 = vld [vmem:[#allocation7 + $0x10] sm:$0xf]
        %v485 = vld [vmem:[#allocation7 + $0x14] sm:$0xf]
        %v486 = vld [vmem:[#allocation7 + $0x18] sm:$0xf]
        %v487 = vld [vmem:[#allocation7 + $0x1c] sm:$0xf]
        %v488 = vld [vmem:[#allocation7 + $0x20] sm:$0xf]
        %v489 = vld [vmem:[#allocation7 + $0x24] sm:$0xf]
        %v490 = vld [vmem:[#allocation7 + $0x28] sm:$0xf]
        %v491 = vld [vmem:[#allocation7 + $0x2c] sm:$0xf]
        %v492 = vld [vmem:[#allocation7 + $0x30] sm:$0xf]
        %v493 = vld [vmem:[#allocation7 + $0x34] sm:$0xf]
        %v494 = vld [vmem:[#allocation7 + $0x38] sm:$0xf]
        %v495 = vld [vmem:[#allocation7 + $0x3c] sm:$0xf]
        %v496 = vld [vmem:[%s4] sm:$0x1]
        %v498 = vlaneseq
        %v499 = vshrl.u32 %v498, 7
        %v500 = vsub.s32 0, %v499
        %v501 = vrot.slane %v496, %v500
        %v519 = vunpack.c.l.b16 %v480
        %v520 = vunpack.c.l.b16 %v481
        %v521 = vunpack.c.l.b16 %v482
        %v522 = vunpack.c.l.b16 %v483
        %v523 = vunpack.c.l.b16 %v484
        %v524 = vunpack.c.l.b16 %v485
        %v525 = vunpack.c.l.b16 %v486
        %v526 = vunpack.c.l.b16 %v487
        %v527 = vunpack.c.l.b16 %v488
        %v528 = vunpack.c.l.b16 %v489
        %v529 = vunpack.c.l.b16 %v490
        %v530 = vunpack.c.l.b16 %v491
        %v531 = vunpack.c.l.b16 %v492
        %v532 = vunpack.c.l.b16 %v493
        %v533 = vunpack.c.l.b16 %v494
        %v534 = vunpack.c.l.b16 %v495
        %v535 = vpack.c.b16 %v520, %v519
        %v536 = vpack.c.b16 %v522, %v521
        %v537 = vpack.c.b16 %v524, %v523
        %v538 = vpack.c.b16 %v526, %v525
        %v539 = vpack.c.b16 %v528, %v527
        %v540 = vpack.c.b16 %v530, %v529
        %v541 = vpack.c.b16 %v532, %v531
        %v542 = vpack.c.b16 %v534, %v533
        %551 = vmatprep.subr.bf16.mxu0 0
        %552 = vmatpush1.bf16.msra.mxu0 %v535
        %553 = vmatprep.subr.bf16.mxu0 0
        %554 = vmatpush1.bf16.msra.mxu0 %v536
        %555 = vmatprep.subr.bf16.mxu0 0
        %556 = vmatpush1.bf16.msra.mxu0 %v537
        %557 = vmatprep.subr.bf16.mxu0 0
        %558 = vmatpush1.bf16.msra.mxu0 %v538
        %559 = vmatprep.subr.bf16.mxu0 0
        %560 = vmatpush1.bf16.msra.mxu0 %v539
        %561 = vmatprep.subr.bf16.mxu0 0
        %562 = vmatpush1.bf16.msra.mxu0 %v540
        %563 = vmatprep.subr.bf16.mxu0 0
        %564 = vmatpush1.bf16.msra.mxu0 %v541
        %565 = vmatprep.subr.bf16.mxu0 0
        %566 = vmatpush1.bf16.msra.mxu0 %v542
        %567 = vmatprep.subr.bf16.mxu0 0
        %568 = vmatpush1.bf16.msra.mxu0 0
        %569 = vmatprep.subr.bf16.mxu0 0
        %570 = vmatpush1.bf16.msra.mxu0 0
        %571 = vmatprep.subr.bf16.mxu0 0
        %572 = vmatpush1.bf16.msra.mxu0 0
        %573 = vmatprep.subr.bf16.mxu0 0
        %574 = vmatpush1.bf16.msra.mxu0 0
        %575 = vmatprep.subr.bf16.mxu0 0
        %576 = vmatpush1.bf16.msra.mxu0 0
        %577 = vmatprep.subr.bf16.mxu0 0
        %578 = vmatpush1.bf16.msra.mxu0 0
        %579 = vmatprep.subr.bf16.mxu0 0
        %580 = vmatpush1.bf16.msra.mxu0 0
        %581 = vmatprep.subr.bf16.mxu0 0
        %582 = vmatpush1.bf16.msra.mxu0 0
        %583 = vmatprep.mubr.bf16.mxu0 0
        %584 = vmatmul.mubr.bf16.gmra.mrb[0].mxu0 %v478
        %v585 = vpop.f32.mrb[0].mxu0
        %v586 = vadd.f32 %v501, %v585
        %v587 = vpop.f32.mrb[0].mxu0
        %v588 = vpop.f32.mrb[0].mxu0
        %v589 = vadd.f32 %v501, %v588
        %v590 = vpop.f32.mrb[0].mxu0
        %591 = vmatprep.mubr.bf16.mxu0 0
        %592 = vmatmul.mubr.bf16.gmra.mrb[0].mxu0 %v479
        %v593 = vpop.f32.mrb[0].mxu0
        %v594 = vadd.f32 %v501, %v593
        %v595 = vpop.f32.mrb[0].mxu0
        %v596 = vpop.f32.mrb[0].mxu0
        %v597 = vpop.f32.mrb[0].mxu0
        %598 = vdwg.mxu0
        %v599 = vpack.c.bf16 %v589, %v586
        %v600 = vpack.c.bf16 %v594, %v594
        %v601 = vmax.bf16 %v599, 0
        %v602 = vmax.bf16 %v600, 0
        %v603 = vld [vmem:[#allocation8] sm:$0xf]
        %v604 = vld [vmem:[#allocation8 + $0x4] sm:$0xf]
        %v605 = vld [vmem:[#allocation8 + $0x8] sm:$0xf]
        %v606 = vld [vmem:[#allocation8 + $0xc] sm:$0xf]
        %v607 = vld [vmem:[#allocation8 + $0x10] sm:$0xf]
        %v608 = vld [vmem:[#allocation8 + $0x14] sm:$0xf]
        %v609 = vld [vmem:[#allocation8 + $0x18] sm:$0xf]
        %v610 = vld [vmem:[#allocation8 + $0x1c] sm:$0xf]
        %v611 = vld [vmem:[#allocation8 + $0x20] sm:$0xf]
        %v612 = vld [vmem:[#allocation8 + $0x24] sm:$0xf]
        %v613 = vld [vmem:[#allocation8 + $0x28] sm:$0xf]
        %v614 = vld [vmem:[#allocation8 + $0x2c] sm:$0xf]
        %v615 = vld [vmem:[#allocation8 + $0x30] sm:$0xf]
        %v616 = vld [vmem:[#allocation8 + $0x34] sm:$0xf]
        %v617 = vld [vmem:[#allocation8 + $0x38] sm:$0xf]
        %v618 = vld [vmem:[#allocation8 + $0x3c] sm:$0xf]
        %v619 = vld [vmem:[%s6] sm:$0x1]
        %v621 = vlaneseq
        %v622 = vshrl.u32 %v621, 7
        %v623 = vsub.s32 0, %v622
        %v624 = vrot.slane %v619, %v623
        %v642 = vunpack.c.l.b16 %v603
        %v643 = vunpack.c.l.b16 %v604
        %v644 = vunpack.c.l.b16 %v605
        %v645 = vunpack.c.l.b16 %v606
        %v646 = vunpack.c.l.b16 %v607
        %v647 = vunpack.c.l.b16 %v608
        %v648 = vunpack.c.l.b16 %v609
        %v649 = vunpack.c.l.b16 %v610
        %v650 = vunpack.c.l.b16 %v611
        %v651 = vunpack.c.l.b16 %v612
        %v652 = vunpack.c.l.b16 %v613
        %v653 = vunpack.c.l.b16 %v614
        %v654 = vunpack.c.l.b16 %v615
        %v655 = vunpack.c.l.b16 %v616
        %v656 = vunpack.c.l.b16 %v617
        %v657 = vunpack.c.l.b16 %v618
        %v658 = vpack.c.b16 %v643, %v642
        %v659 = vpack.c.b16 %v645, %v644
        %v660 = vpack.c.b16 %v647, %v646
        %v661 = vpack.c.b16 %v649, %v648
        %v662 = vpack.c.b16 %v651, %v650
        %v663 = vpack.c.b16 %v653, %v652
        %v664 = vpack.c.b16 %v655, %v654
        %v665 = vpack.c.b16 %v657, %v656
        %674 = vmatprep.subr.bf16.mxu0 0
        %675 = vmatpush1.bf16.msra.mxu0 %v658
        %676 = vmatprep.subr.bf16.mxu0 0
        %677 = vmatpush1.bf16.msra.mxu0 %v659
        %678 = vmatprep.subr.bf16.mxu0 0
        %679 = vmatpush1.bf16.msra.mxu0 %v660
        %680 = vmatprep.subr.bf16.mxu0 0
        %681 = vmatpush1.bf16.msra.mxu0 %v661
        %682 = vmatprep.subr.bf16.mxu0 0
        %683 = vmatpush1.bf16.msra.mxu0 %v662
        %684 = vmatprep.subr.bf16.mxu0 0
        %685 = vmatpush1.bf16.msra.mxu0 %v663
        %686 = vmatprep.subr.bf16.mxu0 0
        %687 = vmatpush1.bf16.msra.mxu0 %v664
        %688 = vmatprep.subr.bf16.mxu0 0
        %689 = vmatpush1.bf16.msra.mxu0 %v665
        %690 = vmatprep.subr.bf16.mxu0 0
        %691 = vmatpush1.bf16.msra.mxu0 0
        %692 = vmatprep.subr.bf16.mxu0 0
        %693 = vmatpush1.bf16.msra.mxu0 0
        %694 = vmatprep.subr.bf16.mxu0 0
        %695 = vmatpush1.bf16.msra.mxu0 0
        %696 = vmatprep.subr.bf16.mxu0 0
        %697 = vmatpush1.bf16.msra.mxu0 0
        %698 = vmatprep.subr.bf16.mxu0 0
        %699 = vmatpush1.bf16.msra.mxu0 0
        %700 = vmatprep.subr.bf16.mxu0 0
        %701 = vmatpush1.bf16.msra.mxu0 0
        %702 = vmatprep.subr.bf16.mxu0 0
        %703 = vmatpush1.bf16.msra.mxu0 0
        %704 = vmatprep.subr.bf16.mxu0 0
        %705 = vmatpush1.bf16.msra.mxu0 0
        %706 = vmatprep.mubr.bf16.mxu0 0
        %707 = vmatmul.mubr.bf16.gmra.mrb[0].mxu0 %v601
        %v708 = vpop.f32.mrb[0].mxu0
        %v709 = vadd.f32 %v624, %v708
        %v710 = vpop.f32.mrb[0].mxu0
        %v711 = vpop.f32.mrb[0].mxu0
        %v712 = vadd.f32 %v624, %v711
        %v713 = vpop.f32.mrb[0].mxu0
        %714 = vmatprep.mubr.bf16.mxu0 0
        %715 = vmatmul.mubr.bf16.gmra.mrb[0].mxu0 %v602
        %v716 = vpop.f32.mrb[0].mxu0
        %v717 = vadd.f32 %v624, %v716
        %v718 = vpop.f32.mrb[0].mxu0
        %v719 = vpop.f32.mrb[0].mxu0
        %v720 = vpop.f32.mrb[0].mxu0
        %721 = vdwg.mxu0
        %v722 = vmax.f32 %v709, 0.0
        %v723 = vmax.f32 %v712, 0.0
        %v724 = vmax.f32 %v717, 0.0
        %v725 = vlaneseq
        %v726 = vand.u32 %v725, 127
        %vm727 = vcmp.lt.s32.totalorder %v726, 8
        %v728 = vsel %vm727, %v722, -inf
        %v729 = vsel %vm727, %v723, -inf
        %v730 = vsel %vm727, %v724, -inf
        %731 = vmax.xlane.f32.xlu0 %v728
        %v732 = vpop.xlane.xlu0 %731
        %733 = vmax.xlane.f32.xlu0 %v729
        %v734 = vpop.xlane.xlu0 %733
        %735 = vmax.xlane.f32.xlu0 %v730
        %v736 = vpop.xlane.xlu0 %735
        %v737 = vsub.f32 %v728, %v732
        %v738 = vsub.f32 %v729, %v734
        %v739 = vsub.f32 %v730, %v736
        %v740 = vmul.f32 %v737, 1.442695
        %v741 = vpow.pop %v740
        %v742 = vmul.f32 %v738, 1.442695
        %v743 = vpow.pop %v742
        %v744 = vmul.f32 %v739, 1.442695
        %v745 = vpow.pop %v744
        %746 = vadd.xlane.f32.xlu0 %v741
        %v747 = vpop.xlane.xlu0 %746
        %748 = vadd.xlane.f32.xlu0 %v743
        %v749 = vpop.xlane.xlu0 %748
        %750 = vadd.xlane.f32.xlu0 %v745
        %v751 = vpop.xlane.xlu0 %750
        %v752 = vrcp.pop %v747
        %v753 = vmul.f32 %v741, %v752
        %v754 = vrcp.pop %v749
        %v755 = vmul.f32 %v743, %v754
        %v756 = vrcp.pop %v751
        %v757 = vmul.f32 %v745, %v756
        %758 = vst [vmem:[%s340] sm:$0xff] %v753
        %759 = vst [vmem:[%s340 + $0x8] sm:$0xff] %v755
        %760 = vst [vmem:[%s340 + $0x10] sm:$0xff] %v757
        %s761 = sand.u32 %s186, 1
        %s762 = scalar_lea.sflag [#allocation4], %s761
        %s763 = sand.u32 %s186, 1
        %s764 = smul.addr %s763, 24
        %s765 = scalar_lea.vmem [#allocation10], %s764
        // Predicated region
        $region65: #{tpu_custom_call.1} parent=47 // pred_check
          %p766 = pneg %p196
        $region66: #{tpu_custom_call.1} parent=47 // pred_check_branch
          %768 = sbr.rel (%p766) target = $region68
        $region67: #{tpu_custom_call.1} parent=47 // pred_region
          %s769 = smul.u32 3, %s26
          %s771 = ssub.s32 384, 384
          %772 = vsyncadd %s762, %s771
          %s773 = smul.addr %s769, 128
          %s774 = scalar_lea.hbm %s7, %s773
          %s775 = sshll.u32 %s765, 4
          %s776 = int_to_ptr.vmem [resolvable:$true] %s775
          %781 = dma.vmem_to_hbm [thread:$0]  %s776, 384, %s774, %s762, 128, 128, 8
        $region68: #{tpu_custom_call.1} parent=47 // pred_fallthru
          _
      $region48: #{tpu_custom_call.1} parent=5 // pred_fallthru
        _
      %p782 = scmp.le.s32.totalorder 2, %s21
      // Predicated region
      $region69: #{tpu_custom_call.1} parent=5 // pred_check
        %p783 = pneg %p782
      $region70: #{tpu_custom_call.1} parent=5 // pred_check_branch
        %785 = sbr.rel (%p783) target = $region72
      $region71: #{tpu_custom_call.1} parent=5 // pred_region
        %s786 = ssub.s32 %s21, 2
        // Predicated region
        $region73: #{tpu_custom_call.1} parent=71 // pred_check
          %p787 = pneg %p202
        $region74: #{tpu_custom_call.1} parent=71 // pred_check_branch
          %789 = sbr.rel (%p787) target = $region76
        $region75: #{tpu_custom_call.1} parent=71 // pred_region
          %s790 = sand.u32 %s187, 1
          %s791 = scalar_lea.sflag [#allocation4], %s790
          %s792 = sand.u32 %s187, 1
          %s793 = smul.addr %s792, 24
          %s794 = scalar_lea.vmem [#allocation10], %s793
          %795 = dma.done %s791, 384
        $region76: #{tpu_custom_call.1} parent=71 // pred_fallthru
          _
      $region72: #{tpu_custom_call.1} parent=5 // pred_fallthru
        _
    $region6: #{tpu_custom_call.1} parent=1 // loop_footer
      %s25 = sadd.s32 1, %s21
    $region7: #{tpu_custom_call.1} parent=1 // loop_footer_branch
      %20 = sbr.rel target = $region3
    $region8: #{tpu_custom_call.1} parent=1 // loop_exit
      _
    %796 = vsyncpa [#allocation3], 1
    %s797 = scalar_lea.sflag [#allocation3], 1
    %798 = vsyncpa %s797, 1
    %799 = vsyncpa [#allocation6], 1
    %800 = vsyncpa [#allocation9], 1
    %801 = vsyncpa [#allocation4], 1
    %s802 = scalar_lea.sflag [#allocation4], 1
    %803 = vsyncpa %s802, 1

// kernel: tpu_custom_call.1
$region0: #{tpu_custom_call.1}
  #allocation0 [shape = 'u32[]', space=smem, size = 0x4, offset = 0x4, fixed_abs, tag = 'smem constant byte address 0x4 - core index']
  #allocation1 [shape = 'u32[144,128]{1,0:T(1,128)}', space=vmem, size = 0x12000, scoped, tag = 'internal scratch']
  %s0 = inlined_call_operand.hbm [shape: bf16[48,128], index: 0, kind: input, shape index: {}]
  %s1 = inlined_call_operand.hbm [shape: bf16[128,128], index: 1, kind: input, shape index: {}]
  %s2 = inlined_call_operand.vmem [shape: f32[1,128], index: 2, kind: input, shape index: {}]
  %s3 = inlined_call_operand.hbm [shape: bf16[128,128], index: 3, kind: input, shape index: {}]
  %s4 = inlined_call_operand.vmem [shape: f32[1,128], index: 4, kind: input, shape index: {}]
  %s5 = inlined_call_operand.hbm [shape: bf16[128,128], index: 5, kind: input, shape index: {}]
  %s6 = inlined_call_operand.vmem [shape: f32[1,128], index: 6, kind: input, shape index: {}]
  %s7 = inlined_call_operand.hbm [shape: f32[48,128], index: 7, kind: output, shape index: {}]
  %s8 = sld [smem:[#allocation0]]
  $region77: #{tpu_custom_call.1} parent=0
    _
  %s10 = ssub.s32 1, %s8
  %s11 = scalar_select 0, %s10, %s8
  $region1: #{tpu_custom_call.1} parent=0
    #allocation2 [shape = 'u8[12288]{0}', space=vmem, size = 0x3000, scoped, tag = 'input window, operand 0']
    #allocation3 [shape = 's32[2]{0}', space=sflag, size = 0x8, scoped, tag = 'scoped memory for tpu_custom_call.1']
    #allocation4 [shape = 's32[2]{0}', space=sflag, size = 0x8, scoped, tag = 'scoped memory for tpu_custom_call.1']
    #allocation5 [shape = 'u8[32768]{0}', space=vmem, size = 0x8000, scoped, tag = 'input window, operand 1, single buffered']
    #allocation6 [shape = 's32[1]{0}', space=sflag, size = 0x4, scoped, tag = 'scoped memory for tpu_custom_call.1']
    #allocation7 [shape = 'u8[32768]{0}', space=vmem, size = 0x8000, scoped, tag = 'input window, operand 3, single buffered']
    #allocation8 [shape = 'u8[32768]{0}', space=vmem, size = 0x8000, scoped, tag = 'input window, operand 5, single buffered']
    #allocation9 [shape = 's32[1]{0}', space=sflag, size = 0x4, scoped, tag = 'scoped memory for tpu_custom_call.1']
    #allocation10 [shape = 'u8[24576]{0}', space=vmem, size = 0x6000, scoped, tag = 'output window, operand 0']
    %12 = vsyncpa [#allocation3], 0
    %s13 = scalar_lea.sflag [#allocation3], 1
    %14 = vsyncpa %s13, 0
    %15 = vsyncpa [#allocation6], 0
    %16 = vsyncpa [#allocation9], 0
    %17 = vsyncpa [#allocation4], 0
    %s18 = scalar_lea.sflag [#allocation4], 1
    %19 = vsyncpa %s18, 0
    loop: start=0, step=1, limit=4
    $region2: #{tpu_custom_call.1} parent=1 // loop_pre_header
      _
    $region3: #{tpu_custom_call.1} parent=1 // loop_header
      %s21 = sphi 0, %s25
      %p22 = scmp.ge.s32.totalorder %s21, 4
      %s31 = sphi 0, %s33
      %s34 = sphi 0, %s31
      %s35 = sphi 0, %s34
      %s51 = sphi 0, %s35
      %s55 = sphi 0, %s55
      %s57 = sphi 0, %s55
      %s58 = sphi 0, %s57
      %s72 = sphi 0, %s58
      %s76 = sphi 0, %s76
      %s78 = sphi 0, %s76
      %s79 = sphi 0, %s78
      %s93 = sphi 0, %s79
      %s97 = sphi 0, %s97
      %s99 = sphi 0, %s97
      %s100 = sphi 0, %s99
      %s114 = sphi 0, %s100
      %s118 = sphi 0, %s118
      %s120 = sphi 0, %s118
      %s121 = sphi 0, %s120
      %s135 = sphi 0, %s121
      %s139 = sphi 0, %s139
      %s141 = sphi 0, %s139
      %s142 = sphi 0, %s141
      %s156 = sphi 0, %s142
      %s160 = sphi 0, %s160
      %s162 = sphi 0, %s160
      %s163 = sphi 0, %s162
      %s177 = sphi 0, %s163
      %s183 = sphi 0, %s185
      %s186 = sphi 0, %s183
      %s187 = sphi 0, %s186
      %s203 = sphi 0, %s187
    $region4: #{tpu_custom_call.1} parent=1 // loop_header_branch
      %24 = sbr.rel (%p22) target = $region8
    $region5: #{tpu_custom_call.1} parent=1 // loop_body
      %s26 = ssub.s32 %s21, 1
      %s27 = ssub.s32 %s21, 2
      %s28 = sadd.s32 %s21, 1
      %s29 = ssub.s32 %s21, %s28
      %p30 = scmp.eq.s32.totalorder %s29, 0
      %s32 = sadd.s32 %s31, 1
      %s33 = scalar_select %p30, %s31, %s32
      %p36 = pneg %p30
      %p37 = scmp.eq.s32.totalorder %s21, 1
      %p38 = por %p36, %p37
      %p39 = scmp.ne.s32.totalorder %s31, %s34
      %p40 = scmp.eq.s32.totalorder %s21, 0
      %p41 = por %p39, %p40
      %p42 = scmp.ne.s32.totalorder %s31, %s34
      %p43 = scmp.eq.s32.totalorder %s26, 1
      %p44 = por %p42, %p43
      %p45 = scmp.ne.s32.totalorder %s34, %s35
      %p46 = scmp.eq.s32.totalorder %s26, 0
      %p47 = por %p45, %p46
      %p48 = scmp.ne.s32.totalorder %s34, %s35
      %p49 = scmp.eq.s32.totalorder %s27, 1
      %p50 = por %p48, %p49
      %p52 = scmp.ne.s32.totalorder %s35, %s51
      %p53 = scmp.eq.s32.totalorder %s27, 0
      %p54 = por %p52, %p53
      %s56 = sadd.s32 %s55, 1
      %p59 = scmp.eq.s32.totalorder %s21, 1
      %p60 = scmp.ne.s32.totalorder %s55, %s57
      %p61 = scmp.eq.s32.totalorder %s21, 0
      %p62 = por %p60, %p61
      %p63 = scmp.ne.s32.totalorder %s55, %s57
      %p64 = scmp.eq.s32.totalorder %s26, 1
      %p65 = por %p63, %p64
      %p66 = scmp.ne.s32.totalorder %s57, %s58
      %p67 = scmp.eq.s32.totalorder %s26, 0
      %p68 = por %p66, %p67
      %p69 = scmp.ne.s32.totalorder %s57, %s58
      %p70 = scmp.eq.s32.totalorder %s27, 1
      %p71 = por %p69, %p70
      %p73 = scmp.ne.s32.totalorder %s58, %s72
      %p74 = scmp.eq.s32.totalorder %s27, 0
      %p75 = por %p73, %p74
      %s77 = sadd.s32 %s76, 1
      %p80 = scmp.eq.s32.totalorder %s21, 1
      %p81 = scmp.ne.s32.totalorder %s76, %s78
      %p82 = scmp.eq.s32.totalorder %s21, 0
      %p83 = por %p81, %p82
      %p84 = scmp.ne.s32.totalorder %s76, %s78
      %p85 = scmp.eq.s32.totalorder %s26, 1
      %p86 = por %p84, %p85
      %p87 = scmp.ne.s32.totalorder %s78, %s79
      %p88 = scmp.eq.s32.totalorder %s26, 0
      %p89 = por %p87, %p88
      %p90 = scmp.ne.s32.totalorder %s78, %s79
      %p91 = scmp.eq.s32.totalorder %s27, 1
      %p92 = por %p90, %p91
      %p94 = scmp.ne.s32.totalorder %s79, %s93
      %p95 = scmp.eq.s32.totalorder %s27, 0
      %p96 = por %p94, %p95
      %s98 = sadd.s32 %s97, 1
      %p101 = scmp.eq.s32.totalorder %s21, 1
      %p102 = scmp.ne.s32.totalorder %s97, %s99
      %p103 = scmp.eq.s32.totalorder %s21, 0
      %p104 = por %p102, %p103
      %p105 = scmp.ne.s32.totalorder %s97, %s99
      %p106 = scmp.eq.s32.totalorder %s26, 1
      %p107 = por %p105, %p106
      %p108 = scmp.ne.s32.totalorder %s99, %s100
      %p109 = scmp.eq.s32.totalorder %s26, 0
      %p110 = por %p108, %p109
      %p111 = scmp.ne.s32.totalorder %s99, %s100
      %p112 = scmp.eq.s32.totalorder %s27, 1
      %p113 = por %p111, %p112
      %p115 = scmp.ne.s32.totalorder %s100, %s114
      %p116 = scmp.eq.s32.totalorder %s27, 0
      %p117 = por %p115, %p116
      %s119 = sadd.s32 %s118, 1
      %p122 = scmp.eq.s32.totalorder %s21, 1
      %p123 = scmp.ne.s32.totalorder %s118, %s120
      %p124 = scmp.eq.s32.totalorder %s21, 0
      %p125 = por %p123, %p124
      %p126 = scmp.ne.s32.totalorder %s118, %s120
      %p127 = scmp.eq.s32.totalorder %s26, 1
      %p128 = por %p126, %p127
      %p129 = scmp.ne.s32.totalorder %s120, %s121
      %p130 = scmp.eq.s32.totalorder %s26, 0
      %p131 = por %p129, %p130
      %p132 = scmp.ne.s32.totalorder %s120, %s121
      %p133 = scmp.eq.s32.totalorder %s27, 1
      %p134 = por %p132, %p133
      %p136 = scmp.ne.s32.totalorder %s121, %s135
      %p137 = scmp.eq.s32.totalorder %s27, 0
      %p138 = por %p136, %p137
      %s140 = sadd.s32 %s139, 1
      %p143 = scmp.eq.s32.totalorder %s21, 1
      %p144 = scmp.ne.s32.totalorder %s139, %s141
      %p145 = scmp.eq.s32.totalorder %s21, 0
      %p146 = por %p144, %p145
      %p147 = scmp.ne.s32.totalorder %s139, %s141
      %p148 = scmp.eq.s32.totalorder %s26, 1
      %p149 = por %p147, %p148
      %p150 = scmp.ne.s32.totalorder %s141, %s142
      %p151 = scmp.eq.s32.totalorder %s26, 0
      %p152 = por %p150, %p151
      %p153 = scmp.ne.s32.totalorder %s141, %s142
      %p154 = scmp.eq.s32.totalorder %s27, 1
      %p155 = por %p153, %p154
      %p157 = scmp.ne.s32.totalorder %s142, %s156
      %p158 = scmp.eq.s32.totalorder %s27, 0
      %p159 = por %p157, %p158
      %s161 = sadd.s32 %s160, 1
      %p164 = scmp.eq.s32.totalorder %s21, 1
      %p165 = scmp.ne.s32.totalorder %s160, %s162
      %p166 = scmp.eq.s32.totalorder %s21, 0
      %p167 = por %p165, %p166
      %p168 = scmp.ne.s32.totalorder %s160, %s162
      %p169 = scmp.eq.s32.totalorder %s26, 1
      %p170 = por %p168, %p169
      %p171 = scmp.ne.s32.totalorder %s162, %s163
      %p172 = scmp.eq.s32.totalorder %s26, 0
      %p173 = por %p171, %p172
      %p174 = scmp.ne.s32.totalorder %s162, %s163
      %p175 = scmp.eq.s32.totalorder %s27, 1
      %p176 = por %p174, %p175
      %p178 = scmp.ne.s32.totalorder %s163, %s177
      %p179 = scmp.eq.s32.totalorder %s27, 0
      %p180 = por %p178, %p179
      %s181 = ssub.s32 %s21, %s28
      %p182 = scmp.eq.s32.totalorder %s181, 0
      %s184 = sadd.s32 %s183, 1
      %s185 = scalar_select %p182, %s183, %s184
      %p188 = pneg %p182
      %p189 = scmp.eq.s32.totalorder %s21, 1
      %p190 = por %p188, %p189
      %p191 = scmp.ne.s32.totalorder %s183, %s186
      %p192 = scmp.eq.s32.totalorder %s21, 0
      %p193 = por %p191, %p192
      %p194 = scmp.ne.s32.totalorder %s183, %s186
      %p195 = scmp.eq.s32.totalorder %s26, 1
      %p196 = por %p194, %p195
      %p197 = scmp.ne.s32.totalorder %s186, %s187
      %p198 = scmp.eq.s32.totalorder %s26, 0
      %p199 = por %p197, %p198
      %p200 = scmp.ne.s32.totalorder %s186, %s187
      %p201 = scmp.eq.s32.totalorder %s27, 1
      %p202 = por %p200, %p201
      %p204 = scmp.ne.s32.totalorder %s187, %s203
      %p205 = scmp.eq.s32.totalorder %s27, 0
      %p206 = por %p204, %p205
      %p207 = scmp.le.s32.totalorder 1, %s21
      %p208 = scmp.lt.s32.totalorder %s21, 3
      %p209 = pnand %p207, %p208
      %p210 = pneg %p209
      // Predicated region
      $region9: #{tpu_custom_call.1} parent=5 // pred_check
        _
      $region10: #{tpu_custom_call.1} parent=5 // pred_check_branch
        %212 = sbr.rel (%p209) target = $region12
      $region11: #{tpu_custom_call.1} parent=5 // pred_region
        %s213 = ssub.s32 %s21, 1
        // Predicated region
        $region13: #{tpu_custom_call.1} parent=11 // pred_check
          %p214 = pneg %p68
        $region14: #{tpu_custom_call.1} parent=11 // pred_check_branch
          %216 = sbr.rel (%p214) target = $region16
        $region15: #{tpu_custom_call.1} parent=11 // pred_region
          %s218 = ssub.s32 1024, 1024
          %219 = vsyncadd [#allocation6], %s218
          %s220 = sshll.u32 [#allocation5], 4
          %s221 = int_to_ptr.vmem [resolvable:$true] %s220
          %226 = dma.hbm_to_vmem [thread:$0]  %s1, 1024, %s221, [#allocation6], 64, 64, 4
        $region16: #{tpu_custom_call.1} parent=11 // pred_fallthru
          _
        // Predicated region
        $region17: #{tpu_custom_call.1} parent=11 // pred_check
          %p227 = pneg %p89
        $region18: #{tpu_custom_call.1} parent=11 // pred_check_branch
          %229 = sbr.rel (%p227) target = $region20
        $region19: #{tpu_custom_call.1} parent=11 // pred_region
          _
        $region20: #{tpu_custom_call.1} parent=11 // pred_fallthru
          _
        // Predicated region
        $region21: #{tpu_custom_call.1} parent=11 // pred_check
          %p230 = pneg %p110
        $region22: #{tpu_custom_call.1} parent=11 // pred_check_branch
          %232 = sbr.rel (%p230) target = $region24
        $region23: #{tpu_custom_call.1} parent=11 // pred_region
          %s234 = ssub.s32 1024, 1024
          %235 = vsyncadd [#allocation6], %s234
          %s236 = sshll.u32 [#allocation7], 4
          %s237 = int_to_ptr.vmem [resolvable:$true] %s236
          %242 = dma.hbm_to_vmem [thread:$0]  %s3, 1024, %s237, [#allocation6], 64, 64, 4
        $region24: #{tpu_custom_call.1} parent=11 // pred_fallthru
          _
        // Predicated region
        $region25: #{tpu_custom_call.1} parent=11 // pred_check
          %p243 = pneg %p131
        $region26: #{tpu_custom_call.1} parent=11 // pred_check_branch
          %245 = sbr.rel (%p243) target = $region28
        $region27: #{tpu_custom_call.1} parent=11 // pred_region
          _
        $region28: #{tpu_custom_call.1} parent=11 // pred_fallthru
          _
        // Predicated region
        $region29: #{tpu_custom_call.1} parent=11 // pred_check
          %p246 = pneg %p152
        $region30: #{tpu_custom_call.1} parent=11 // pred_check_branch
          %248 = sbr.rel (%p246) target = $region32
        $region31: #{tpu_custom_call.1} parent=11 // pred_region
          %s250 = ssub.s32 1024, 1024
          %251 = vsyncadd [#allocation9], %s250
          %s252 = sshll.u32 [#allocation8], 4
          %s253 = int_to_ptr.vmem [resolvable:$true] %s252
          %258 = dma.hbm_to_vmem [thread:$0]  %s5, 1024, %s253, [#allocation9], 64, 64, 4
        $region32: #{tpu_custom_call.1} parent=11 // pred_fallthru
          _
        // Predicated region
        $region33: #{tpu_custom_call.1} parent=11 // pred_check
          %p259 = pneg %p173
        $region34: #{tpu_custom_call.1} parent=11 // pred_check_branch
          %261 = sbr.rel (%p259) target = $region36
        $region35: #{tpu_custom_call.1} parent=11 // pred_region
          _
        $region36: #{tpu_custom_call.1} parent=11 // pred_fallthru
          _
      $region12: #{tpu_custom_call.1} parent=5 // pred_fallthru
        _
      %p262 = scmp.lt.s32.totalorder %s21, 2
      // Predicated region
      $region37: #{tpu_custom_call.1} parent=5 // pred_check
        %p263 = pneg %p262
      $region38: #{tpu_custom_call.1} parent=5 // pred_check_branch
        %265 = sbr.rel (%p263) target = $region40
      $region39: #{tpu_custom_call.1} parent=5 // pred_region
        // Predicated region
        $region41: #{tpu_custom_call.1} parent=39 // pred_check
          %p266 = pneg %p41
        $region42: #{tpu_custom_call.1} parent=39 // pred_check_branch
          %268 = sbr.rel (%p266) target = $region44
        $region43: #{tpu_custom_call.1} parent=39 // pred_region
          %s269 = sand.u32 %s31, 1
          %s270 = scalar_lea.sflag [#allocation3], %s269
          %s271 = sand.u32 %s31, 1
          %s272 = smul.addr %s271, 12
          %s273 = scalar_lea.vmem [#allocation2], %s272
          %s274 = smul.u32 3, %s21
          %s276 = ssub.s32 192, 192
          %277 = vsyncadd %s270, %s276
          %s278 = smul.addr %s274, 64
          %s279 = scalar_lea.hbm %s0, %s278
          %s280 = sshll.u32 %s273, 4
          %s281 = int_to_ptr.vmem [resolvable:$true] %s280
          %286 = dma.hbm_to_vmem [thread:$0]  %s279, 192, %s281, %s270, 64, 64, 4
        $region44: #{tpu_custom_call.1} parent=39 // pred_fallthru
          _
      $region40: #{tpu_custom_call.1} parent=5 // pred_fallthru
        _
      %p287 = scmp.le.s32.totalorder 1, %s21
      %p288 = scmp.lt.s32.totalorder %s21, 3
      %p289 = pnand %p287, %p288
      %p290 = pneg %p289
      // Predicated region
      $region45: #{tpu_custom_call.1} parent=5 // pred_check
        _
      $region46: #{tpu_custom_call.1} parent=5 // pred_check_branch
        %292 = sbr.rel (%p289) target = $region48
      $region47: #{tpu_custom_call.1} parent=5 // pred_region
        %s293 = ssub.s32 %s21, 1
        %s294 = sand.u32 %s34, 1
        %s295 = scalar_lea.sflag [#allocation3], %s294
        %s296 = sand.u32 %s34, 1
        %s297 = smul.addr %s296, 12
        %s298 = scalar_lea.vmem [#allocation2], %s297
        // Predicated region
        $region49: #{tpu_custom_call.1} parent=47 // pred_check
          %p299 = pneg %p47
        $region50: #{tpu_custom_call.1} parent=47 // pred_check_branch
          %301 = sbr.rel (%p299) target = $region52
        $region51: #{tpu_custom_call.1} parent=47 // pred_region
          %302 = dma.done %s295, 192
        $region52: #{tpu_custom_call.1} parent=47 // pred_fallthru
          _
        // Predicated region
        $region53: #{tpu_custom_call.1} parent=47 // pred_check
          %p303 = pneg %p68
        $region54: #{tpu_custom_call.1} parent=47 // pred_check_branch
          %305 = sbr.rel (%p303) target = $region56
        $region55: #{tpu_custom_call.1} parent=47 // pred_region
          %306 = dma.done [#allocation6], 1024
        $region56: #{tpu_custom_call.1} parent=47 // pred_fallthru
          _
        // Predicated region
        $region57: #{tpu_custom_call.1} parent=47 // pred_check
          %p307 = pneg %p110
        $region58: #{tpu_custom_call.1} parent=47 // pred_check_branch
          %309 = sbr.rel (%p307) target = $region60
        $region59: #{tpu_custom_call.1} parent=47 // pred_region
          %310 = dma.done [#allocation6], 1024
        $region60: #{tpu_custom_call.1} parent=47 // pred_fallthru
          _
        // Predicated region
        $region61: #{tpu_custom_call.1} parent=47 // pred_check
          %p311 = pneg %p152
        $region62: #{tpu_custom_call.1} parent=47 // pred_check_branch
          %313 = sbr.rel (%p311) target = $region64
        $region63: #{tpu_custom_call.1} parent=47 // pred_region
          %314 = dma.done [#allocation9], 1024
        $region64: #{tpu_custom_call.1} parent=47 // pred_fallthru
          _
        %s315 = sand.u32 %s34, 1
        %s316 = scalar_lea.sflag [#allocation3], %s315
        %s317 = sand.u32 %s34, 1
        %s318 = smul.addr %s317, 12
        %s319 = scalar_lea.vmem [#allocation2], %s318
        %p320 = pneg %p47
        %p321 = pneg %p44
        %p322 = pneg %p68
        %p323 = pneg %p65
        %p324 = pneg %p89
        %p325 = pneg %p86
        %p326 = pneg %p110
        %p327 = pneg %p107
        %p328 = pneg %p131
        %p329 = pneg %p128
        %p330 = pneg %p152
        %p331 = pneg %p149
        %p332 = pneg %p173
        %p333 = pneg %p170
        %p334 = pneg %p199
        %p335 = pneg %p196
        %s336 = sand.u32 %s186, 1
        %s337 = scalar_lea.sflag [#allocation4], %s336
        %s338 = sand.u32 %s186, 1
        %s339 = smul.addr %s338, 24
        %s340 = scalar_lea.vmem [#allocation10], %s339
        %s341 = smul.u32 3, %s26
        %s342 = smul.u32 3, %s26
        %v344 = vld [vmem:[%s298] sm:$0xf]
        %v345 = vld [vmem:[%s298 + $0x4] sm:$0xf]
        %v346 = vld [vmem:[%s298 + $0x8] sm:$0xf]
        %v347 = vld [vmem:[#allocation5] sm:$0xf]
        %v348 = vld [vmem:[#allocation5 + $0x4] sm:$0xf]
        %v349 = vld [vmem:[#allocation5 + $0x8] sm:$0xf]
        %v350 = vld [vmem:[#allocation5 + $0xc] sm:$0xf]
        %v351 = vld [vmem:[#allocation5 + $0x10] sm:$0xf]
        %v352 = vld [vmem:[#allocation5 + $0x14] sm:$0xf]
        %v353 = vld [vmem:[#allocation5 + $0x18] sm:$0xf]
        %v354 = vld [vmem:[#allocation5 + $0x1c] sm:$0xf]
        %v355 = vld [vmem:[#allocation5 + $0x20] sm:$0xf]
        %v356 = vld [vmem:[#allocation5 + $0x24] sm:$0xf]
        %v357 = vld [vmem:[#allocation5 + $0x28] sm:$0xf]
        %v358 = vld [vmem:[#allocation5 + $0x2c] sm:$0xf]
        %v359 = vld [vmem:[#allocation5 + $0x30] sm:$0xf]
        %v360 = vld [vmem:[#allocation5 + $0x34] sm:$0xf]
        %v361 = vld [vmem:[#allocation5 + $0x38] sm:$0xf]
        %v362 = vld [vmem:[#allocation5 + $0x3c] sm:$0xf]
        %v363 = vld [vmem:[%s2] sm:$0x1]
        %v365 = vlaneseq
        %v366 = vshrl.u32 %v365, 7
        %v367 = vsub.s32 0, %v366
        %v368 = vrot.slane %v363, %v367
        %v373 = vunpack.c.l.b16 %v344
        %v374 = vunpack.c.l.b16 %v345
        %v375 = vunpack.c.l.b16 %v346
        %v376 = vpack.c.b16 %v374, %v373
        %v377 = vpack.c.b16 %v375, %v375
        %v396 = vunpack.c.l.b16 %v347
        %v397 = vunpack.c.l.b16 %v348
        %v398 = vunpack.c.l.b16 %v349
        %v399 = vunpack.c.l.b16 %v350
        %v400 = vunpack.c.l.b16 %v351
        %v401 = vunpack.c.l.b16 %v352
        %v402 = vunpack.c.l.b16 %v353
        %v403 = vunpack.c.l.b16 %v354
        %v404 = vunpack.c.l.b16 %v355
        %v405 = vunpack.c.l.b16 %v356
        %v406 = vunpack.c.l.b16 %v357
        %v407 = vunpack.c.l.b16 %v358
        %v408 = vunpack.c.l.b16 %v359
        %v409 = vunpack.c.l.b16 %v360
        %v410 = vunpack.c.l.b16 %v361
        %v411 = vunpack.c.l.b16 %v362
        %v412 = vpack.c.b16 %v397, %v396
        %v413 = vpack.c.b16 %v399, %v398
        %v414 = vpack.c.b16 %v401, %v400
        %v415 = vpack.c.b16 %v403, %v402
        %v416 = vpack.c.b16 %v405, %v404
        %v417 = vpack.c.b16 %v407, %v406
        %v418 = vpack.c.b16 %v409, %v408
        %v419 = vpack.c.b16 %v411, %v410
        %428 = vmatprep.subr.bf16.mxu0 0
        %429 = vmatpush1.bf16.msra.mxu0 %v412
        %430 = vmatprep.subr.bf16.mxu0 0
        %431 = vmatpush1.bf16.msra.mxu0 %v413
        %432 = vmatprep.subr.bf16.mxu0 0
        %433 = vmatpush1.bf16.msra.mxu0 %v414
        %434 = vmatprep.subr.bf16.mxu0 0
        %435 = vmatpush1.bf16.msra.mxu0 %v415
        %436 = vmatprep.subr.bf16.mxu0 0
        %437 = vmatpush1.bf16.msra.mxu0 %v416
        %438 = vmatprep.subr.bf16.mxu0 0
        %439 = vmatpush1.bf16.msra.mxu0 %v417
        %440 = vmatprep.subr.bf16.mxu0 0
        %441 = vmatpush1.bf16.msra.mxu0 %v418
        %442 = vmatprep.subr.bf16.mxu0 0
        %443 = vmatpush1.bf16.msra.mxu0 %v419
        %444 = vmatprep.subr.bf16.mxu0 0
        %445 = vmatpush1.bf16.msra.mxu0 0
        %446 = vmatprep.subr.bf16.mxu0 0
        %447 = vmatpush1.bf16.msra.mxu0 0
        %448 = vmatprep.subr.bf16.mxu0 0
        %449 = vmatpush1.bf16.msra.mxu0 0
        %450 = vmatprep.subr.bf16.mxu0 0
        %451 = vmatpush1.bf16.msra.mxu0 0
        %452 = vmatprep.subr.bf16.mxu0 0
        %453 = vmatpush1.bf16.msra.mxu0 0
        %454 = vmatprep.subr.bf16.mxu0 0
        %455 = vmatpush1.bf16.msra.mxu0 0
        %456 = vmatprep.subr.bf16.mxu0 0
        %457 = vmatpush1.bf16.msra.mxu0 0
        %458 = vmatprep.subr.bf16.mxu0 0
        %459 = vmatpush1.bf16.msra.mxu0 0
        %460 = vmatprep.mubr.bf16.mxu0 0
        %461 = vmatmul.mubr.bf16.gmra.mrb[0].mxu0 %v376
        %v462 = vpop.f32.mrb[0].mxu0
        %v463 = vadd.f32 %v368, %v462
        %v464 = vpop.f32.mrb[0].mxu0
        %v465 = vpop.f32.mrb[0].mxu0
        %v466 = vadd.f32 %v368, %v465
        %v467 = vpop.f32.mrb[0].mxu0
        %468 = vmatprep.mubr.bf16.mxu0 0
        %469 = vmatmul.mubr.bf16.gmra.mrb[0].mxu0 %v377
        %v470 = vpop.f32.mrb[0].mxu0
        %v471 = vadd.f32 %v368, %v470
        %v472 = vpop.f32.mrb[0].mxu0
        %v473 = vpop.f32.mrb[0].mxu0
        %v474 = vpop.f32.mrb[0].mxu0
        %475 = vdwg.mxu0
        %v476 = vpack.c.bf16 %v466, %v463
        %v477 = vpack.c.bf16 %v471, %v471
        %v478 = vmax.bf16 %v476, 0
        %v479 = vmax.bf16 %v477, 0
        %v480 = vld [vmem:[#allocation7] sm:$0xf]
        %v481 = vld [vmem:[#allocation7 + $0x4] sm:$0xf]
        %v482 = vld [vmem:[#allocation7 + $0x8] sm:$0xf]
        %v483 = vld [vmem:[#allocation7 + $0xc] sm:$0xf]
        %v484 = vld [vmem:[#allocation7 + $0x10] sm:$0xf]
        %v485 = vld [vmem:[#allocation7 + $0x14] sm:$0xf]
        %v486 = vld [vmem:[#allocation7 + $0x18] sm:$0xf]
        %v487 = vld [vmem:[#allocation7 + $0x1c] sm:$0xf]
        %v488 = vld [vmem:[#allocation7 + $0x20] sm:$0xf]
        %v489 = vld [vmem:[#allocation7 + $0x24] sm:$0xf]
        %v490 = vld [vmem:[#allocation7 + $0x28] sm:$0xf]
        %v491 = vld [vmem:[#allocation7 + $0x2c] sm:$0xf]
        %v492 = vld [vmem:[#allocation7 + $0x30] sm:$0xf]
        %v493 = vld [vmem:[#allocation7 + $0x34] sm:$0xf]
        %v494 = vld [vmem:[#allocation7 + $0x38] sm:$0xf]
        %v495 = vld [vmem:[#allocation7 + $0x3c] sm:$0xf]
        %v496 = vld [vmem:[%s4] sm:$0x1]
        %v498 = vlaneseq
        %v499 = vshrl.u32 %v498, 7
        %v500 = vsub.s32 0, %v499
        %v501 = vrot.slane %v496, %v500
        %v519 = vunpack.c.l.b16 %v480
        %v520 = vunpack.c.l.b16 %v481
        %v521 = vunpack.c.l.b16 %v482
        %v522 = vunpack.c.l.b16 %v483
        %v523 = vunpack.c.l.b16 %v484
        %v524 = vunpack.c.l.b16 %v485
        %v525 = vunpack.c.l.b16 %v486
        %v526 = vunpack.c.l.b16 %v487
        %v527 = vunpack.c.l.b16 %v488
        %v528 = vunpack.c.l.b16 %v489
        %v529 = vunpack.c.l.b16 %v490
        %v530 = vunpack.c.l.b16 %v491
        %v531 = vunpack.c.l.b16 %v492
        %v532 = vunpack.c.l.b16 %v493
        %v533 = vunpack.c.l.b16 %v494
        %v534 = vunpack.c.l.b16 %v495
        %v535 = vpack.c.b16 %v520, %v519
        %v536 = vpack.c.b16 %v522, %v521
        %v537 = vpack.c.b16 %v524, %v523
        %v538 = vpack.c.b16 %v526, %v525
        %v539 = vpack.c.b16 %v528, %v527
        %v540 = vpack.c.b16 %v530, %v529
        %v541 = vpack.c.b16 %v532, %v531
        %v542 = vpack.c.b16 %v534, %v533
        %551 = vmatprep.subr.bf16.mxu0 0
        %552 = vmatpush1.bf16.msra.mxu0 %v535
        %553 = vmatprep.subr.bf16.mxu0 0
        %554 = vmatpush1.bf16.msra.mxu0 %v536
        %555 = vmatprep.subr.bf16.mxu0 0
        %556 = vmatpush1.bf16.msra.mxu0 %v537
        %557 = vmatprep.subr.bf16.mxu0 0
        %558 = vmatpush1.bf16.msra.mxu0 %v538
        %559 = vmatprep.subr.bf16.mxu0 0
        %560 = vmatpush1.bf16.msra.mxu0 %v539
        %561 = vmatprep.subr.bf16.mxu0 0
        %562 = vmatpush1.bf16.msra.mxu0 %v540
        %563 = vmatprep.subr.bf16.mxu0 0
        %564 = vmatpush1.bf16.msra.mxu0 %v541
        %565 = vmatprep.subr.bf16.mxu0 0
        %566 = vmatpush1.bf16.msra.mxu0 %v542
        %567 = vmatprep.subr.bf16.mxu0 0
        %568 = vmatpush1.bf16.msra.mxu0 0
        %569 = vmatprep.subr.bf16.mxu0 0
        %570 = vmatpush1.bf16.msra.mxu0 0
        %571 = vmatprep.subr.bf16.mxu0 0
        %572 = vmatpush1.bf16.msra.mxu0 0
        %573 = vmatprep.subr.bf16.mxu0 0
        %574 = vmatpush1.bf16.msra.mxu0 0
        %575 = vmatprep.subr.bf16.mxu0 0
        %576 = vmatpush1.bf16.msra.mxu0 0
        %577 = vmatprep.subr.bf16.mxu0 0
        %578 = vmatpush1.bf16.msra.mxu0 0
        %579 = vmatprep.subr.bf16.mxu0 0
        %580 = vmatpush1.bf16.msra.mxu0 0
        %581 = vmatprep.subr.bf16.mxu0 0
        %582 = vmatpush1.bf16.msra.mxu0 0
        %583 = vmatprep.mubr.bf16.mxu0 0
        %584 = vmatmul.mubr.bf16.gmra.mrb[0].mxu0 %v478
        %v585 = vpop.f32.mrb[0].mxu0
        %v586 = vadd.f32 %v501, %v585
        %v587 = vpop.f32.mrb[0].mxu0
        %v588 = vpop.f32.mrb[0].mxu0
        %v589 = vadd.f32 %v501, %v588
        %v590 = vpop.f32.mrb[0].mxu0
        %591 = vmatprep.mubr.bf16.mxu0 0
        %592 = vmatmul.mubr.bf16.gmra.mrb[0].mxu0 %v479
        %v593 = vpop.f32.mrb[0].mxu0
        %v594 = vadd.f32 %v501, %v593
        %v595 = vpop.f32.mrb[0].mxu0
        %v596 = vpop.f32.mrb[0].mxu0
        %v597 = vpop.f32.mrb[0].mxu0
        %598 = vdwg.mxu0
        %v599 = vpack.c.bf16 %v589, %v586
        %v600 = vpack.c.bf16 %v594, %v594
        %v601 = vmax.bf16 %v599, 0
        %v602 = vmax.bf16 %v600, 0
        %v603 = vld [vmem:[#allocation8] sm:$0xf]
        %v604 = vld [vmem:[#allocation8 + $0x4] sm:$0xf]
        %v605 = vld [vmem:[#allocation8 + $0x8] sm:$0xf]
        %v606 = vld [vmem:[#allocation8 + $0xc] sm:$0xf]
        %v607 = vld [vmem:[#allocation8 + $0x10] sm:$0xf]
        %v608 = vld [vmem:[#allocation8 + $0x14] sm:$0xf]
        %v609 = vld [vmem:[#allocation8 + $0x18] sm:$0xf]
        %v610 = vld [vmem:[#allocation8 + $0x1c] sm:$0xf]
        %v611 = vld [vmem:[#allocation8 + $0x20] sm:$0xf]
        %v612 = vld [vmem:[#allocation8 + $0x24] sm:$0xf]
        %v613 = vld [vmem:[#allocation8 + $0x28] sm:$0xf]
        %v614 = vld [vmem:[#allocation8 + $0x2c] sm:$0xf]
        %v615 = vld [vmem:[#allocation8 + $0x30] sm:$0xf]
        %v616 = vld [vmem:[#allocation8 + $0x34] sm:$0xf]
        %v617 = vld [vmem:[#allocation8 + $0x38] sm:$0xf]
        %v618 = vld [vmem:[#allocation8 + $0x3c] sm:$0xf]
        %v619 = vld [vmem:[%s6] sm:$0x1]
        %v621 = vlaneseq
        %v622 = vshrl.u32 %v621, 7
        %v623 = vsub.s32 0, %v622
        %v624 = vrot.slane %v619, %v623
        %v642 = vunpack.c.l.b16 %v603
        %v643 = vunpack.c.l.b16 %v604
        %v644 = vunpack.c.l.b16 %v605
        %v645 = vunpack.c.l.b16 %v606
        %v646 = vunpack.c.l.b16 %v607
        %v647 = vunpack.c.l.b16 %v608
        %v648 = vunpack.c.l.b16 %v609
        %v649 = vunpack.c.l.b16 %v610
        %v650 = vunpack.c.l.b16 %v611
        %v651 = vunpack.c.l.b16 %v612
        %v652 = vunpack.c.l.b16 %v613
        %v653 = vunpack.c.l.b16 %v614
        %v654 = vunpack.c.l.b16 %v615
        %v655 = vunpack.c.l.b16 %v616
        %v656 = vunpack.c.l.b16 %v617
        %v657 = vunpack.c.l.b16 %v618
        %v658 = vpack.c.b16 %v643, %v642
        %v659 = vpack.c.b16 %v645, %v644
        %v660 = vpack.c.b16 %v647, %v646
        %v661 = vpack.c.b16 %v649, %v648
        %v662 = vpack.c.b16 %v651, %v650
        %v663 = vpack.c.b16 %v653, %v652
        %v664 = vpack.c.b16 %v655, %v654
        %v665 = vpack.c.b16 %v657, %v656
        %674 = vmatprep.subr.bf16.mxu0 0
        %675 = vmatpush1.bf16.msra.mxu0 %v658
        %676 = vmatprep.subr.bf16.mxu0 0
        %677 = vmatpush1.bf16.msra.mxu0 %v659
        %678 = vmatprep.subr.bf16.mxu0 0
        %679 = vmatpush1.bf16.msra.mxu0 %v660
        %680 = vmatprep.subr.bf16.mxu0 0
        %681 = vmatpush1.bf16.msra.mxu0 %v661
        %682 = vmatprep.subr.bf16.mxu0 0
        %683 = vmatpush1.bf16.msra.mxu0 %v662
        %684 = vmatprep.subr.bf16.mxu0 0
        %685 = vmatpush1.bf16.msra.mxu0 %v663
        %686 = vmatprep.subr.bf16.mxu0 0
        %687 = vmatpush1.bf16.msra.mxu0 %v664
        %688 = vmatprep.subr.bf16.mxu0 0
        %689 = vmatpush1.bf16.msra.mxu0 %v665
        %690 = vmatprep.subr.bf16.mxu0 0
        %691 = vmatpush1.bf16.msra.mxu0 0
        %692 = vmatprep.subr.bf16.mxu0 0
        %693 = vmatpush1.bf16.msra.mxu0 0
        %694 = vmatprep.subr.bf16.mxu0 0
        %695 = vmatpush1.bf16.msra.mxu0 0
        %696 = vmatprep.subr.bf16.mxu0 0
        %697 = vmatpush1.bf16.msra.mxu0 0
        %698 = vmatprep.subr.bf16.mxu0 0
        %699 = vmatpush1.bf16.msra.mxu0 0
        %700 = vmatprep.subr.bf16.mxu0 0
        %701 = vmatpush1.bf16.msra.mxu0 0
        %702 = vmatprep.subr.bf16.mxu0 0
        %703 = vmatpush1.bf16.msra.mxu0 0
        %704 = vmatprep.subr.bf16.mxu0 0
        %705 = vmatpush1.bf16.msra.mxu0 0
        %706 = vmatprep.mubr.bf16.mxu0 0
        %707 = vmatmul.mubr.bf16.gmra.mrb[0].mxu0 %v601
        %v708 = vpop.f32.mrb[0].mxu0
        %v709 = vadd.f32 %v624, %v708
        %v710 = vpop.f32.mrb[0].mxu0
        %v711 = vpop.f32.mrb[0].mxu0
        %v712 = vadd.f32 %v624, %v711
        %v713 = vpop.f32.mrb[0].mxu0
        %714 = vmatprep.mubr.bf16.mxu0 0
        %715 = vmatmul.mubr.bf16.gmra.mrb[0].mxu0 %v602
        %v716 = vpop.f32.mrb[0].mxu0
        %v717 = vadd.f32 %v624, %v716
        %v718 = vpop.f32.mrb[0].mxu0
        %v719 = vpop.f32.mrb[0].mxu0
        %v720 = vpop.f32.mrb[0].mxu0
        %721 = vdwg.mxu0
        %v722 = vmax.f32 %v709, 0.0
        %v723 = vmax.f32 %v712, 0.0
        %v724 = vmax.f32 %v717, 0.0
        %v725 = vlaneseq
        %v726 = vand.u32 %v725, 127
        %vm727 = vcmp.lt.s32.totalorder %v726, 8
        %v728 = vsel %vm727, %v722, -inf
        %v729 = vsel %vm727, %v723, -inf
        %v730 = vsel %vm727, %v724, -inf
        %731 = vmax.xlane.f32.xlu0 %v728
        %v732 = vpop.xlane.xlu0 %731
        %733 = vmax.xlane.f32.xlu0 %v729
        %v734 = vpop.xlane.xlu0 %733
        %735 = vmax.xlane.f32.xlu0 %v730
        %v736 = vpop.xlane.xlu0 %735
        %v737 = vsub.f32 %v728, %v732
        %v738 = vsub.f32 %v729, %v734
        %v739 = vsub.f32 %v730, %v736
        %v740 = vmul.f32 %v737, 1.442695
        %v741 = vpow.pop %v740
        %v742 = vmul.f32 %v738, 1.442695
        %v743 = vpow.pop %v742
        %v744 = vmul.f32 %v739, 1.442695
        %v745 = vpow.pop %v744
        %746 = vadd.xlane.f32.xlu0 %v741
        %v747 = vpop.xlane.xlu0 %746
        %748 = vadd.xlane.f32.xlu0 %v743
        %v749 = vpop.xlane.xlu0 %748
        %750 = vadd.xlane.f32.xlu0 %v745
        %v751 = vpop.xlane.xlu0 %750
        %v752 = vrcp.pop %v747
        %v753 = vmul.f32 %v741, %v752
        %v754 = vrcp.pop %v749
        %v755 = vmul.f32 %v743, %v754
        %v756 = vrcp.pop %v751
        %v757 = vmul.f32 %v745, %v756
        %758 = vst [vmem:[%s340] sm:$0xff] %v753
        %759 = vst [vmem:[%s340 + $0x8] sm:$0xff] %v755
        %760 = vst [vmem:[%s340 + $0x10] sm:$0xff] %v757
        %s761 = sand.u32 %s186, 1
        %s762 = scalar_lea.sflag [#allocation4], %s761
        %s763 = sand.u32 %s186, 1
        %s764 = smul.addr %s763, 24
        %s765 = scalar_lea.vmem [#allocation10], %s764
        // Predicated region
        $region65: #{tpu_custom_call.1} parent=47 // pred_check
          %p766 = pneg %p196
        $region66: #{tpu_custom_call.1} parent=47 // pred_check_branch
          %768 = sbr.rel (%p766) target = $region68
        $region67: #{tpu_custom_call.1} parent=47 // pred_region
          %s769 = smul.u32 3, %s26
          %s771 = ssub.s32 384, 384
          %772 = vsyncadd %s762, %s771
          %s773 = smul.addr %s769, 128
          %s774 = scalar_lea.hbm %s7, %s773
          %s775 = sshll.u32 %s765, 4
          %s776 = int_to_ptr.vmem [resolvable:$true] %s775
          %781 = dma.vmem_to_hbm [thread:$0]  %s776, 384, %s774, %s762, 128, 128, 8
        $region68: #{tpu_custom_call.1} parent=47 // pred_fallthru
          _
      $region48: #{tpu_custom_call.1} parent=5 // pred_fallthru
        _
      %p782 = scmp.le.s32.totalorder 2, %s21
      // Predicated region
      $region69: #{tpu_custom_call.1} parent=5 // pred_check
        %p783 = pneg %p782
      $region70: #{tpu_custom_call.1} parent=5 // pred_check_branch
        %785 = sbr.rel (%p783) target = $region72
      $region71: #{tpu_custom_call.1} parent=5 // pred_region
        %s786 = ssub.s32 %s21, 2
        // Predicated region
        $region73: #{tpu_custom_call.1} parent=71 // pred_check
          %p787 = pneg %p202
        $region74: #{tpu_custom_call.1} parent=71 // pred_check_branch
          %789 = sbr.rel (%p787) target = $region76
        $region75: #{tpu_custom_call.1} parent=71 // pred_region
          %s790 = sand.u32 %s187, 1
          %s791 = scalar_lea.sflag [#allocation4], %s790
          %s792 = sand.u32 %s187, 1
          %s793 = smul.addr %s792, 24
          %s794 = scalar_lea.vmem [#allocation10], %s793
          %795 = dma.done %s791, 384
        $region76: #{tpu_custom_call.1} parent=71 // pred_fallthru
          _
      $region72: #{tpu_custom_call.1} parent=5 // pred_fallthru
        _
    $region6: #{tpu_custom_call.1} parent=1 // loop_footer
      %s25 = sadd.s32 1, %s21
    $region7: #{tpu_custom_call.1} parent=1 // loop_footer_branch
      %20 = sbr.rel target = $region3
    $region8: #{tpu_custom_call.1} parent=1 // loop_exit
      _
    %796 = vsyncpa [#allocation3], 1
    %s797 = scalar_lea.sflag [#allocation3], 1
    %798 = vsyncpa %s797, 1
    %799 = vsyncpa [#allocation6], 1
    %800 = vsyncpa [#allocation9], 1
    %801 = vsyncpa [#allocation4], 1
    %s802 = scalar_lea.sflag [#allocation4], 1
    %803 = vsyncpa %s802, 1

</llo_original>
